<compile_context>
chip_gen: v5e
topology: v5e:2x2
jax: 0.10.0
libtpu: 0.0.40
codegen_flags: <defaults>
</compile_context>

<pallas_src>
import functools

import jax
import jax.numpy as jnp
import numpy as np
from jax.experimental import pallas as pl
from jax.experimental.pallas import tpu as pltpu


# ----------------------------- Pallas kernel --------------------------------

def _fused_ext_gnn_kernel(rel_coef_ref, rel_feat_ref, node_feat_ref,
                          agg_op_ref,
                          w_rel_cat_ref, w_ent_cat_ref,
                          bo_ref, bi_ref, bs_ref, br_ref,
                          ent_out_ref, rel_out_ref,
                          agg_scratch_ref,
                          *, num_rel, num_layers, use_bf16):
    cdt = jnp.bfloat16 if use_bf16 else jnp.float32

    def mmw(a, w):
        # activation cast to the (pre-cast) weight dtype; f32 MXU accumulation
        return jnp.dot(a.astype(cdt), w, preferred_element_type=jnp.float32)

    # rel_emb = rel_coef @ rel_feat, kept f32 (tiny: (2R,bases) @ (bases,rel_dim))
    rel_emb = jnp.dot(rel_coef_ref[...], rel_feat_ref[...],
                      preferred_element_type=jnp.float32)        # (2R, rel_dim)
    ent = node_feat_ref[...]                                     # (N, D)  f32
    agg_op = agg_op_ref[...]                                     # (N, 2R+2N) f32

    two_r, rel_dim = rel_emb.shape
    n_nodes, ent_dim = ent.shape

    # relation rows < num_rel use the W_O branch, rows >= num_rel use W_I
    # (2R = 8 rows: one f32 sublane tile, so the where is essentially free)
    noninv_rows = (
        jax.lax.broadcasted_iota(jnp.int32, (two_r, ent_dim), 0) < num_rel)

    for layer in range(num_layers):            # static unroll, all in VMEM
        apply_relu = layer < num_layers - 1

        # fused relation-side matmul: [W_O_rel | W_I_rel | W_R] in one MXU pass
        rel_cat = mmw(rel_emb, w_rel_cat_ref[layer])      # (2R, 2D + rel_dim)
        rel_msg = jnp.where(
            noninv_rows,
            rel_cat[:, :ent_dim] + bo_ref[layer],
            rel_cat[:, ent_dim:2 * ent_dim] + bi_ref[layer])        # (2R, D)
        rel_new = rel_cat[:, 2 * ent_dim:] + br_ref[layer]    # (2R, rel_dim)

        # fused entity-side matmul: [W_O_ent | W_I_ent | W_S] in one MXU pass
        ent_cat = mmw(ent, w_ent_cat_ref[layer])                    # (N, 3D)

        # single K = 2R + 2N aggregation matmul (operands kept f32 so the
        # 1/deg mean weights are not perturbed).  Stores below are plain
        # sublane-offset stores (0, 2R, 2R+N all multiples of 8).
        agg_scratch_ref[0:two_r, :] = rel_msg
        agg_scratch_ref[two_r:two_r + n_nodes, :] = ent_cat[:, :ent_dim]
        agg_scratch_ref[two_r + n_nodes:, :] = ent_cat[:, ent_dim:2 * ent_dim]
        h_agg = jnp.dot(agg_op, agg_scratch_ref[...],
                        preferred_element_type=jnp.float32)         # (N, D)

        ent = ent_cat[:, 2 * ent_dim:] + bs_ref[layer] + h_agg
        rel_emb = rel_new
        if apply_relu:
            ent = jnp.maximum(ent, 0.0)
            rel_emb = jnp.maximum(rel_emb, 0.0)

    ent_out_ref[...] = ent.astype(ent_out_ref.dtype)
    rel_out_ref[...] = rel_emb.astype(rel_out_ref.dtype)


# ------------------------------- wrapper -------------------------------------

def _full_spec(shape):
    ndim = len(shape)
    return pl.BlockSpec(shape, lambda i, _n=ndim: (0,) * _n)


def build_graph_operators(src, dst, etype, num_nodes, num_rel):
    """Normalized mean-aggregation operator, built with O(E) scatter-adds.

    agg_op = [C_norm | BO_norm | BI_norm], shape (N, 2R + 2N), where
      C_norm[v, r]  = #(edges into v with type r)        / deg(v)
      BO_norm[v, u] = #(edges u->v with type <  num_rel) / deg(v)
      BI_norm[v, u] = #(edges u->v with type >= num_rel) / deg(v)
    Rows of zero-in-degree nodes are all-zero (matches DGL mean -> 0).
    Graph is static: build ONCE, outside the per-step forward.
    Contract: relation ids [0, num_rel) are the non-inverse types.
    """
    f32 = jnp.float32
    two_r = 2 * num_rel
    deg = jnp.zeros((num_nodes,), f32).at[dst].add(1.0)
    inv_deg = jnp.where(deg > 0, 1.0 / jnp.maximum(deg, 1.0), 0.0)[:, None]
    c = jnp.zeros((num_nodes, two_r), f32).at[dst, etype].add(1.0)
    noninv = (etype < num_rel).astype(f32)
    bo = jnp.zeros((num_nodes, num_nodes), f32).at[dst, src].add(noninv)
    bi = jnp.zeros((num_nodes, num_nodes), f32).at[dst, src].add(1.0 - noninv)
    return jnp.concatenate([c * inv_deg, bo * inv_deg, bi * inv_deg], axis=1)


@functools.partial(jax.jit, static_argnames=("num_rel", "num_layers",
                                              "use_bf16"))
def ext_gnn_forward(params, node_feat, agg_op, num_rel, num_layers,
                    use_bf16=True):
    n_nodes, ent_dim = node_feat.shape
    rel_dim = params["rel_feat"].shape[1]
    two_r = params["rel_coef"].shape[0]
    layers = params["layers"]
    wdt = jnp.bfloat16 if use_bf16 else jnp.float32

    # Per-layer fused RHS weights, pre-cast to bf16 in HBM: halves weight DMA
    # and fills the wide MXU with one pass per LHS instead of three.
    w_rel_cat = jnp.stack([
        jnp.concatenate([lp["W_O_w"][:rel_dim], lp["W_I_w"][:rel_dim],
                         lp["W_R_w"]], axis=1) for lp in layers]).astype(wdt)
    w_ent_cat = jnp.stack([
        jnp.concatenate([lp["W_O_w"][rel_dim:], lp["W_I_w"][rel_dim:],
                         lp["W_S_w"]], axis=1) for lp in layers]).astype(wdt)
    b_o = jnp.stack([lp["W_O_b"] for lp in layers])          # (L, 1, D) f32
    b_i = jnp.stack([lp["W_I_b"] for lp in layers])
    b_s = jnp.stack([lp["W_S_b"] for lp in layers])
    b_r = jnp.stack([lp["W_R_b"] for lp in layers])          # (L, 1, rel_dim)

    inputs = (params["rel_coef"], params["rel_feat"], node_feat, agg_op,
              w_rel_cat, w_ent_cat, b_o, b_i, b_s, b_r)

    flops = 2 * two_r * params["rel_coef"].shape[1] * rel_dim
    flops += num_layers * 2 * (
        two_r * rel_dim * (2 * ent_dim + rel_dim)
        + n_nodes * ent_dim * 3 * ent_dim
        + n_nodes * (two_r + 2 * n_nodes) * ent_dim)
    in_bytes = sum(int(x.size) * x.dtype.itemsize for x in inputs)
    out_bytes = (n_nodes * ent_dim + two_r * rel_dim) * 4

    # TODO(synk): for large N, tile the node axis ("parallel" grid so v7x's
    # second TensorCore is used), stream BO/BI row-tiles via BlockSpec, and
    # beyond a few thousand nodes replace the dense (N, 2N) operators with a
    # PrefetchScalarGridSpec CSR/segment gather.
    return pl.pallas_call(
        functools.partial(_fused_ext_gnn_kernel, num_rel=num_rel,
                          num_layers=num_layers, use_bf16=use_bf16),
        out_shape=(jax.ShapeDtypeStruct((n_nodes, ent_dim), jnp.float32),
                   jax.ShapeDtypeStruct((two_r, rel_dim), jnp.float32)),
        grid=(1,),
        in_specs=[_full_spec(x.shape) for x in inputs],
        out_specs=(_full_spec((n_nodes, ent_dim)),
                   _full_spec((two_r, rel_dim))),
        scratch_shapes=[pltpu.VMEM((two_r + 2 * n_nodes, ent_dim),
                                   jnp.float32)],
        compiler_params=pltpu.CompilerParams(
            dimension_semantics=("arbitrary",),
            vmem_limit_bytes=32 * 1024 * 1024),
        cost_estimate=pl.CostEstimate(flops=int(flops), transcendentals=0,
                                      bytes_accessed=int(in_bytes + out_bytes)),
    )(*inputs)


# --------------------------- parameter setup ---------------------------------

def init_params(key, num_rel, num_rel_bases, rel_dim, ent_dim, num_layers,
                scale=0.1):
    ks = jax.random.split(key, 2 + 8 * num_layers)
    it = iter(ks)

    def mat(shape):
        return (scale * jax.random.normal(next(it), shape)).astype(jnp.float32)

    params = {
        "rel_coef": mat((2 * num_rel, num_rel_bases)),
        "rel_feat": mat((num_rel_bases, rel_dim)),
        "layers": [],
    }
    comp_dim = rel_dim + ent_dim
    for _ in range(num_layers):
        params["layers"].append({
            "W_O_w": mat((comp_dim, ent_dim)), "W_O_b": mat((1, ent_dim)),
            "W_I_w": mat((comp_dim, ent_dim)), "W_I_b": mat((1, ent_dim)),
            "W_S_w": mat((ent_dim, ent_dim)),  "W_S_b": mat((1, ent_dim)),
            "W_R_w": mat((rel_dim, rel_dim)),  "W_R_b": mat((1, rel_dim)),
        })
    return params


# --------------------------- pure-JAX reference ------------------------------
# Faithful per-edge formulation of the PyTorch/DGL module (gather, concat,
# W_O/W_I select per edge, mean scatter), f32 throughout.

def ext_gnn_reference(params, node_feat, src, dst, etype, num_rel, num_layers):
    n_nodes, _ = node_feat.shape
    rel_emb = params["rel_coef"] @ params["rel_feat"]
    onehot = (dst[None, :] == jnp.arange(n_nodes)[:, None]).astype(jnp.float32)
    deg = onehot.sum(axis=1, keepdims=True)
    adj = onehot / jnp.maximum(deg, 1.0)
    mask = (etype < num_rel)[:, None]

    ent = node_feat
    for idx in range(num_layers):
        relu = idx < num_layers - 1
        lp = params["layers"][idx]
        comp = jnp.concatenate([rel_emb[etype], ent[src]], axis=-1)
        m_o = comp @ lp["W_O_w"] + lp["W_O_b"]
        m_i = comp @ lp["W_I_w"] + lp["W_I_b"]
        msg = jnp.where(mask, m_o, m_i)
        h_agg = adj @ msg
        ent = ent @ lp["W_S_w"] + lp["W_S_b"] + h_agg
        rel_emb = rel_emb @ lp["W_R_w"] + lp["W_R_b"]
        if relu:
            ent = jnp.maximum(ent, 0.0)
            rel_emb = jnp.maximum(rel_emb, 0.0)
    return ent, rel_emb


# --------------------------------- main --------------------------------------

if __name__ == "__main__":
    NUM_REL = 4          # 2*NUM_REL = 8 relation types (incl. inverses)
    NUM_REL_BASES = 8
    REL_DIM = 128        # lane-dense feature dims
    ENT_DIM = 128
    NUM_LAYERS = 2
    N_NODES = 64
    N_EDGES = 256

    key = jax.random.PRNGKey(0)
    k_par, k_feat, k_src, k_dst, k_type = jax.random.split(key, 5)

    params = init_params(k_par, NUM_REL, NUM_REL_BASES, REL_DIM, ENT_DIM,
                         NUM_LAYERS)
    node_feat = jax.random.normal(k_feat, (N_NODES, ENT_DIM), jnp.float32)
    src = jax.random.randint(k_src, (N_EDGES,), 0, N_NODES)
    dst = jax.random.randint(k_dst, (N_EDGES,), 0, N_NODES)
    etype = jax.random.randint(k_type, (N_EDGES,), 0, 2 * NUM_REL)

    # Static graph: build the normalized aggregation operator once, outside
    # the forward (O(E) scatter-adds, no dense one-hots).
    agg_op = jax.block_until_ready(
        build_graph_operators(src, dst, etype, N_NODES, NUM_REL))

    ent_out, rel_out = ext_gnn_forward(params, node_feat, agg_op,
                                       NUM_REL, NUM_LAYERS, use_bf16=True)
    ent_out = jax.block_until_ready(ent_out)
    rel_out = jax.block_until_ready(rel_out)

    ent_ref, rel_ref = ext_gnn_reference(params, node_feat, src, dst, etype,
                                         NUM_REL, NUM_LAYERS)
    # The kernel uses bf16-operand / f32-accumulate matmuls over 2 layers, so
    # the expected deviation from the f32 reference is O(1e-2) (bf16 ~3
    # significant decimal digits); worst observed |diff| is ~0.024.  A 5e-2
    # tolerance gives >2x margin while still catching genuine bugs (O(1)).
    np.testing.assert_allclose(np.asarray(ent_out), np.asarray(ent_ref),
                               rtol=5e-2, atol=5e-2)
    np.testing.assert_allclose(np.asarray(rel_out), np.asarray(rel_ref),
                               rtol=5e-2, atol=5e-2)

    print("KERNEL_OK")
</pallas_src>

<mosaic_0001>
module attributes {stable_mosaic.version = 11 : i64} {
  func.func @_fused_ext_gnn_kernel(%arg0: i32, %arg1: memref<8x8xf32, #tpu.memory_space<vmem>>, %arg2: memref<8x128xf32, #tpu.memory_space<vmem>>, %arg3: memref<64x128xf32, #tpu.memory_space<vmem>>, %arg4: memref<64x136xf32, #tpu.memory_space<vmem>>, %arg5: memref<2x128x384xbf16, #tpu.memory_space<vmem>>, %arg6: memref<2x128x384xbf16, #tpu.memory_space<vmem>>, %arg7: memref<2x1x128xf32, #tpu.memory_space<vmem>>, %arg8: memref<2x1x128xf32, #tpu.memory_space<vmem>>, %arg9: memref<2x1x128xf32, #tpu.memory_space<vmem>>, %arg10: memref<2x1x128xf32, #tpu.memory_space<vmem>>, %arg11: memref<64x128xf32, #tpu.memory_space<vmem>>, %arg12: memref<8x128xf32, #tpu.memory_space<vmem>>, %arg13: memref<136x128xf32, #tpu.memory_space<vmem>>) attributes {dimension_semantics = [#tpu.dimension_semantics<arbitrary>], iteration_bounds = array<i64: 1>, scalar_prefetch = 0 : i64, scratch_operands = 1 : i64, tpu.core_type = #tpu.core_type<tc>, window_params = [{pipeline_mode = #tpu.pipeline_mode<synchronous>, transform_indices = @transform_0, window_bounds = array<i64: 8, 8>}, {pipeline_mode = #tpu.pipeline_mode<synchronous>, transform_indices = @transform_1, window_bounds = array<i64: 8, 128>}, {pipeline_mode = #tpu.pipeline_mode<synchronous>, transform_indices = @transform_2, window_bounds = array<i64: 64, 128>}, {pipeline_mode = #tpu.pipeline_mode<synchronous>, transform_indices = @transform_3, window_bounds = array<i64: 64, 136>}, {pipeline_mode = #tpu.pipeline_mode<synchronous>, transform_indices = @transform_4, window_bounds = array<i64: 2, 128, 384>}, {pipeline_mode = #tpu.pipeline_mode<synchronous>, transform_indices = @transform_5, window_bounds = array<i64: 2, 128, 384>}, {pipeline_mode = #tpu.pipeline_mode<synchronous>, transform_indices = @transform_6, window_bounds = array<i64: 2, 1, 128>}, {pipeline_mode = #tpu.pipeline_mode<synchronous>, transform_indices = @transform_7, window_bounds = array<i64: 2, 1, 128>}, {pipeline_mode = #tpu.pipeline_mode<synchronous>, transform_indices = @transform_8, window_bounds = array<i64: 2, 1, 128>}, {pipeline_mode = #tpu.pipeline_mode<synchronous>, transform_indices = @transform_9, window_bounds = array<i64: 2, 1, 128>}, {pipeline_mode = #tpu.pipeline_mode<synchronous>, transform_indices = @transform_10, window_bounds = array<i64: 64, 128>}, {pipeline_mode = #tpu.pipeline_mode<synchronous>, transform_indices = @transform_11, window_bounds = array<i64: 8, 128>}]} {
    %c0 = arith.constant 0 : index
    %c0_0 = arith.constant 0 : index
    %0 = vector.load %arg1[%c0, %c0_0] : memref<8x8xf32, #tpu.memory_space<vmem>>, vector<8x8xf32>
    %c0_1 = arith.constant 0 : index
    %c0_2 = arith.constant 0 : index
    %1 = vector.load %arg2[%c0_1, %c0_2] : memref<8x128xf32, #tpu.memory_space<vmem>>, vector<8x128xf32>
    %cst = arith.constant dense<0.000000e+00> : vector<8x128xf32>
    %2 = tpu.matmul %0, %1, %cst {dimension_numbers = #tpu.dot_dimension_numbers<[1], [0], [0], [1], [0, 0, 1, 1], [], []>} : vector<8x8xf32>, vector<8x128xf32>, vector<8x128xf32> -> vector<8x128xf32>
    %c0_3 = arith.constant 0 : index
    %c0_4 = arith.constant 0 : index
    %3 = vector.load %arg3[%c0_3, %c0_4] : memref<64x128xf32, #tpu.memory_space<vmem>>, vector<64x128xf32>
    %c0_5 = arith.constant 0 : index
    %c0_6 = arith.constant 0 : index
    %4 = vector.load %arg4[%c0_5, %c0_6] : memref<64x136xf32, #tpu.memory_space<vmem>>, vector<64x136xf32>
    %5 = tpu.iota {dimensions = array<i32: 0>} : vector<8x128xi32>
    %c4_i32 = arith.constant 4 : i32
    %6 = vector.broadcast %c4_i32 : i32 to vector<8x128xi32>
    %7 = arith.cmpi slt, %5, %6 : vector<8x128xi32>
    %c0_7 = arith.constant 0 : index
    %c0_8 = arith.constant 0 : index
    %c0_9 = arith.constant 0 : index
    %8 = vector.load %arg5[%c0_7, %c0_8, %c0_9] : memref<2x128x384xbf16, #tpu.memory_space<vmem>>, vector<1x128x384xbf16>
    %9 = vector.shape_cast %8 : vector<1x128x384xbf16> to vector<128x384xbf16>
    %10 = arith.truncf %2 : vector<8x128xf32> to vector<8x128xbf16>
    %cst_10 = arith.constant dense<0.000000e+00> : vector<8x384xf32>
    %11 = tpu.matmul %10, %9, %cst_10 {dimension_numbers = #tpu.dot_dimension_numbers<[1], [0], [0], [1], [0, 0, 1, 1], [], []>} : vector<8x128xbf16>, vector<128x384xbf16>, vector<8x384xf32> -> vector<8x384xf32>
    %12 = vector.extract_strided_slice %11 {offsets = [0, 0], sizes = [8, 128], strides = [1, 1]} : vector<8x384xf32> to vector<8x128xf32>
    %c0_11 = arith.constant 0 : index
    %c0_12 = arith.constant 0 : index
    %c0_13 = arith.constant 0 : index
    %13 = vector.load %arg7[%c0_11, %c0_12, %c0_13] : memref<2x1x128xf32, #tpu.memory_space<vmem>>, vector<1x1x128xf32>
    %14 = vector.shape_cast %13 : vector<1x1x128xf32> to vector<1x128xf32>
    %15 = vector.broadcast %14 : vector<1x128xf32> to vector<8x128xf32>
    %16 = arith.addf %12, %15 : vector<8x128xf32>
    %17 = vector.extract_strided_slice %11 {offsets = [0, 128], sizes = [8, 128], strides = [1, 1]} : vector<8x384xf32> to vector<8x128xf32>
    %c0_14 = arith.constant 0 : index
    %c0_15 = arith.constant 0 : index
    %c0_16 = arith.constant 0 : index
    %18 = vector.load %arg8[%c0_14, %c0_15, %c0_16] : memref<2x1x128xf32, #tpu.memory_space<vmem>>, vector<1x1x128xf32>
    %19 = vector.shape_cast %18 : vector<1x1x128xf32> to vector<1x128xf32>
    %20 = vector.broadcast %19 : vector<1x128xf32> to vector<8x128xf32>
    %21 = arith.addf %17, %20 : vector<8x128xf32>
    %22 = arith.select %7, %16, %21 : vector<8x128xi1>, vector<8x128xf32>
    %23 = vector.extract_strided_slice %11 {offsets = [0, 256], sizes = [8, 128], strides = [1, 1]} : vector<8x384xf32> to vector<8x128xf32>
    %c0_17 = arith.constant 0 : index
    %c0_18 = arith.constant 0 : index
    %c0_19 = arith.constant 0 : index
    %24 = vector.load %arg10[%c0_17, %c0_18, %c0_19] : memref<2x1x128xf32, #tpu.memory_space<vmem>>, vector<1x1x128xf32>
    %25 = vector.shape_cast %24 : vector<1x1x128xf32> to vector<1x128xf32>
    %26 = vector.broadcast %25 : vector<1x128xf32> to vector<8x128xf32>
    %27 = arith.addf %23, %26 : vector<8x128xf32>
    %c0_20 = arith.constant 0 : index
    %c0_21 = arith.constant 0 : index
    %c0_22 = arith.constant 0 : index
    %28 = vector.load %arg6[%c0_20, %c0_21, %c0_22] : memref<2x128x384xbf16, #tpu.memory_space<vmem>>, vector<1x128x384xbf16>
    %29 = vector.shape_cast %28 : vector<1x128x384xbf16> to vector<128x384xbf16>
    %30 = arith.truncf %3 : vector<64x128xf32> to vector<64x128xbf16>
    %cst_23 = arith.constant dense<0.000000e+00> : vector<64x384xf32>
    %31 = tpu.matmul %30, %29, %cst_23 {dimension_numbers = #tpu.dot_dimension_numbers<[1], [0], [0], [1], [0, 0, 1, 1], [], []>} : vector<64x128xbf16>, vector<128x384xbf16>, vector<64x384xf32> -> vector<64x384xf32>
    %c0_24 = arith.constant 0 : index
    %c0_25 = arith.constant 0 : index
    %32 = vector.load %arg13[%c0_24, %c0_25] : memref<136x128xf32, #tpu.memory_space<vmem>>, vector<8x128xf32>
    tpu.vector_store %arg13[%c0_24, %c0_25], %22 {strides = array<i32>} : memref<136x128xf32, #tpu.memory_space<vmem>>, vector<8x128xf32>,
    %33 = vector.extract_strided_slice %31 {offsets = [0, 0], sizes = [64, 128], strides = [1, 1]} : vector<64x384xf32> to vector<64x128xf32>
    %c8 = arith.constant 8 : index
    %c0_26 = arith.constant 0 : index
    %34 = vector.load %arg13[%c8, %c0_26] : memref<136x128xf32, #tpu.memory_space<vmem>>, vector<64x128xf32>
    tpu.vector_store %arg13[%c8, %c0_26], %33 {strides = array<i32>} : memref<136x128xf32, #tpu.memory_space<vmem>>, vector<64x128xf32>,
    %35 = vector.extract_strided_slice %31 {offsets = [0, 128], sizes = [64, 128], strides = [1, 1]} : vector<64x384xf32> to vector<64x128xf32>
    %c72 = arith.constant 72 : index
    %c0_27 = arith.constant 0 : index
    %36 = vector.load %arg13[%c72, %c0_27] : memref<136x128xf32, #tpu.memory_space<vmem>>, vector<64x128xf32>
    tpu.vector_store %arg13[%c72, %c0_27], %35 {strides = array<i32>} : memref<136x128xf32, #tpu.memory_space<vmem>>, vector<64x128xf32>,
    %c0_28 = arith.constant 0 : index
    %c0_29 = arith.constant 0 : index
    %37 = vector.load %arg13[%c0_28, %c0_29] : memref<136x128xf32, #tpu.memory_space<vmem>>, vector<136x128xf32>
    %cst_30 = arith.constant dense<0.000000e+00> : vector<64x128xf32>
    %38 = tpu.matmul %4, %37, %cst_30 {dimension_numbers = #tpu.dot_dimension_numbers<[1], [0], [0], [1], [0, 0, 1, 1], [], []>} : vector<64x136xf32>, vector<136x128xf32>, vector<64x128xf32> -> vector<64x128xf32>
    %39 = vector.extract_strided_slice %31 {offsets = [0, 256], sizes = [64, 128], strides = [1, 1]} : vector<64x384xf32> to vector<64x128xf32>
    %c0_31 = arith.constant 0 : index
    %c0_32 = arith.constant 0 : index
    %c0_33 = arith.constant 0 : index
    %40 = vector.load %arg9[%c0_31, %c0_32, %c0_33] : memref<2x1x128xf32, #tpu.memory_space<vmem>>, vector<1x1x128xf32>
    %41 = vector.shape_cast %40 : vector<1x1x128xf32> to vector<1x128xf32>
    %42 = vector.broadcast %41 : vector<1x128xf32> to vector<64x128xf32>
    %43 = arith.addf %39, %42 : vector<64x128xf32>
    %44 = arith.addf %43, %38 : vector<64x128xf32>
    %cst_34 = arith.constant 0.000000e+00 : f32
    %45 = vector.broadcast %cst_34 : f32 to vector<64x128xf32>
    %46 = arith.maximumf %44, %45 : vector<64x128xf32>
    %cst_35 = arith.constant 0.000000e+00 : f32
    %47 = vector.broadcast %cst_35 : f32 to vector<8x128xf32>
    %48 = arith.maximumf %27, %47 : vector<8x128xf32>
    %c1 = arith.constant 1 : index
    %c0_36 = arith.constant 0 : index
    %c0_37 = arith.constant 0 : index
    %49 = vector.load %arg5[%c1, %c0_36, %c0_37] : memref<2x128x384xbf16, #tpu.memory_space<vmem>>, vector<1x128x384xbf16>
    %50 = vector.shape_cast %49 : vector<1x128x384xbf16> to vector<128x384xbf16>
    %51 = arith.truncf %48 : vector<8x128xf32> to vector<8x128xbf16>
    %cst_38 = arith.constant dense<0.000000e+00> : vector<8x384xf32>
    %52 = tpu.matmul %51, %50, %cst_38 {dimension_numbers = #tpu.dot_dimension_numbers<[1], [0], [0], [1], [0, 0, 1, 1], [], []>} : vector<8x128xbf16>, vector<128x384xbf16>, vector<8x384xf32> -> vector<8x384xf32>
    %53 = vector.extract_strided_slice %52 {offsets = [0, 0], sizes = [8, 128], strides = [1, 1]} : vector<8x384xf32> to vector<8x128xf32>
    %c1_39 = arith.constant 1 : index
    %c0_40 = arith.constant 0 : index
    %c0_41 = arith.constant 0 : index
    %54 = vector.load %arg7[%c1_39, %c0_40, %c0_41] : memref<2x1x128xf32, #tpu.memory_space<vmem>>, vector<1x1x128xf32>
    %55 = vector.shape_cast %54 : vector<1x1x128xf32> to vector<1x128xf32>
    %56 = vector.broadcast %55 : vector<1x128xf32> to vector<8x128xf32>
    %57 = arith.addf %53, %56 : vector<8x128xf32>
    %58 = vector.extract_strided_slice %52 {offsets = [0, 128], sizes = [8, 128], strides = [1, 1]} : vector<8x384xf32> to vector<8x128xf32>
    %c1_42 = arith.constant 1 : index
    %c0_43 = arith.constant 0 : index
    %c0_44 = arith.constant 0 : index
    %59 = vector.load %arg8[%c1_42, %c0_43, %c0_44] : memref<2x1x128xf32, #tpu.memory_space<vmem>>, vector<1x1x128xf32>
    %60 = vector.shape_cast %59 : vector<1x1x128xf32> to vector<1x128xf32>
    %61 = vector.broadcast %60 : vector<1x128xf32> to vector<8x128xf32>
    %62 = arith.addf %58, %61 : vector<8x128xf32>
    %63 = arith.select %7, %57, %62 : vector<8x128xi1>, vector<8x128xf32>
    %64 = vector.extract_strided_slice %52 {offsets = [0, 256], sizes = [8, 128], strides = [1, 1]} : vector<8x384xf32> to vector<8x128xf32>
    %c1_45 = arith.constant 1 : index
    %c0_46 = arith.constant 0 : index
    %c0_47 = arith.constant 0 : index
    %65 = vector.load %arg10[%c1_45, %c0_46, %c0_47] : memref<2x1x128xf32, #tpu.memory_space<vmem>>, vector<1x1x128xf32>
    %66 = vector.shape_cast %65 : vector<1x1x128xf32> to vector<1x128xf32>
    %67 = vector.broadcast %66 : vector<1x128xf32> to vector<8x128xf32>
    %68 = arith.addf %64, %67 : vector<8x128xf32>
    %c1_48 = arith.constant 1 : index
    %c0_49 = arith.constant 0 : index
    %c0_50 = arith.constant 0 : index
    %69 = vector.load %arg6[%c1_48, %c0_49, %c0_50] : memref<2x128x384xbf16, #tpu.memory_space<vmem>>, vector<1x128x384xbf16>
    %70 = vector.shape_cast %69 : vector<1x128x384xbf16> to vector<128x384xbf16>
    %71 = arith.truncf %46 : vector<64x128xf32> to vector<64x128xbf16>
    %cst_51 = arith.constant dense<0.000000e+00> : vector<64x384xf32>
    %72 = tpu.matmul %71, %70, %cst_51 {dimension_numbers = #tpu.dot_dimension_numbers<[1], [0], [0], [1], [0, 0, 1, 1], [], []>} : vector<64x128xbf16>, vector<128x384xbf16>, vector<64x384xf32> -> vector<64x384xf32>
    %c0_52 = arith.constant 0 : index
    %c0_53 = arith.constant 0 : index
    %73 = vector.load %arg13[%c0_52, %c0_53] : memref<136x128xf32, #tpu.memory_space<vmem>>, vector<8x128xf32>
    tpu.vector_store %arg13[%c0_52, %c0_53], %63 {strides = array<i32>} : memref<136x128xf32, #tpu.memory_space<vmem>>, vector<8x128xf32>,
    %74 = vector.extract_strided_slice %72 {offsets = [0, 0], sizes = [64, 128], strides = [1, 1]} : vector<64x384xf32> to vector<64x128xf32>
    %c8_54 = arith.constant 8 : index
    %c0_55 = arith.constant 0 : index
    %75 = vector.load %arg13[%c8_54, %c0_55] : memref<136x128xf32, #tpu.memory_space<vmem>>, vector<64x128xf32>
    tpu.vector_store %arg13[%c8_54, %c0_55], %74 {strides = array<i32>} : memref<136x128xf32, #tpu.memory_space<vmem>>, vector<64x128xf32>,
    %76 = vector.extract_strided_slice %72 {offsets = [0, 128], sizes = [64, 128], strides = [1, 1]} : vector<64x384xf32> to vector<64x128xf32>
    %c72_56 = arith.constant 72 : index
    %c0_57 = arith.constant 0 : index
    %77 = vector.load %arg13[%c72_56, %c0_57] : memref<136x128xf32, #tpu.memory_space<vmem>>, vector<64x128xf32>
    tpu.vector_store %arg13[%c72_56, %c0_57], %76 {strides = array<i32>} : memref<136x128xf32, #tpu.memory_space<vmem>>, vector<64x128xf32>,
    %c0_58 = arith.constant 0 : index
    %c0_59 = arith.constant 0 : index
    %78 = vector.load %arg13[%c0_58, %c0_59] : memref<136x128xf32, #tpu.memory_space<vmem>>, vector<136x128xf32>
    %cst_60 = arith.constant dense<0.000000e+00> : vector<64x128xf32>
    %79 = tpu.matmul %4, %78, %cst_60 {dimension_numbers = #tpu.dot_dimension_numbers<[1], [0], [0], [1], [0, 0, 1, 1], [], []>} : vector<64x136xf32>, vector<136x128xf32>, vector<64x128xf32> -> vector<64x128xf32>
    %80 = vector.extract_strided_slice %72 {offsets = [0, 256], sizes = [64, 128], strides = [1, 1]} : vector<64x384xf32> to vector<64x128xf32>
    %c1_61 = arith.constant 1 : index
    %c0_62 = arith.constant 0 : index
    %c0_63 = arith.constant 0 : index
    %81 = vector.load %arg9[%c1_61, %c0_62, %c0_63] : memref<2x1x128xf32, #tpu.memory_space<vmem>>, vector<1x1x128xf32>
    %82 = vector.shape_cast %81 : vector<1x1x128xf32> to vector<1x128xf32>
    %83 = vector.broadcast %82 : vector<1x128xf32> to vector<64x128xf32>
    %84 = arith.addf %80, %83 : vector<64x128xf32>
    %85 = arith.addf %84, %79 : vector<64x128xf32>
    %c0_64 = arith.constant 0 : index
    %c0_65 = arith.constant 0 : index
    %86 = vector.load %arg11[%c0_64, %c0_65] : memref<64x128xf32, #tpu.memory_space<vmem>>, vector<64x128xf32>
    tpu.vector_store %arg11[%c0_64, %c0_65], %85 {strides = array<i32>} : memref<64x128xf32, #tpu.memory_space<vmem>>, vector<64x128xf32>,
    %c0_66 = arith.constant 0 : index
    %c0_67 = arith.constant 0 : index
    %87 = vector.load %arg12[%c0_66, %c0_67] : memref<8x128xf32, #tpu.memory_space<vmem>>, vector<8x128xf32>
    tpu.vector_store %arg12[%c0_66, %c0_67], %68 {strides = array<i32>} : memref<8x128xf32, #tpu.memory_space<vmem>>, vector<8x128xf32>,
    return
  }
  func.func @transform_0(%arg0: i32) -> (i32, i32) {
    %c0_i32 = arith.constant 0 : i32
    %c0_i32_0 = arith.constant 0 : i32
    %c0_i32_1 = arith.constant 0 : i32
    return %c0_i32, %c0_i32_0 : i32, i32
  }
  func.func @transform_1(%arg0: i32) -> (i32, i32) {
    %c0_i32 = arith.constant 0 : i32
    %c0_i32_0 = arith.constant 0 : i32
    %c0_i32_1 = arith.constant 0 : i32
    return %c0_i32, %c0_i32_0 : i32, i32
  }
  func.func @transform_2(%arg0: i32) -> (i32, i32) {
    %c0_i32 = arith.constant 0 : i32
    %c0_i32_0 = arith.constant 0 : i32
    %c0_i32_1 = arith.constant 0 : i32
    return %c0_i32, %c0_i32_0 : i32, i32
  }
  func.func @transform_3(%arg0: i32) -> (i32, i32) {
    %c0_i32 = arith.constant 0 : i32
    %c0_i32_0 = arith.constant 0 : i32
    %c0_i32_1 = arith.constant 0 : i32
    return %c0_i32, %c0_i32_0 : i32, i32
  }
  func.func @transform_4(%arg0: i32) -> (i32, i32, i32) {
    %c0_i32 = arith.constant 0 : i32
    %c0_i32_0 = arith.constant 0 : i32
    %c0_i32_1 = arith.constant 0 : i32
    %c0_i32_2 = arith.constant 0 : i32
    return %c0_i32, %c0_i32_0, %c0_i32_1 : i32, i32, i32
  }
  func.func @transform_5(%arg0: i32) -> (i32, i32, i32) {
    %c0_i32 = arith.constant 0 : i32
    %c0_i32_0 = arith.constant 0 : i32
    %c0_i32_1 = arith.constant 0 : i32
    %c0_i32_2 = arith.constant 0 : i32
    return %c0_i32, %c0_i32_0, %c0_i32_1 : i32, i32, i32
  }
  func.func @transform_6(%arg0: i32) -> (i32, i32, i32) {
    %c0_i32 = arith.constant 0 : i32
    %c0_i32_0 = arith.constant 0 : i32
    %c0_i32_1 = arith.constant 0 : i32
    %c0_i32_2 = arith.constant 0 : i32
    return %c0_i32, %c0_i32_0, %c0_i32_1 : i32, i32, i32
  }
  func.func @transform_7(%arg0: i32) -> (i32, i32, i32) {
    %c0_i32 = arith.constant 0 : i32
    %c0_i32_0 = arith.constant 0 : i32
    %c0_i32_1 = arith.constant 0 : i32
    %c0_i32_2 = arith.constant 0 : i32
    return %c0_i32, %c0_i32_0, %c0_i32_1 : i32, i32, i32
  }
  func.func @transform_8(%arg0: i32) -> (i32, i32, i32) {
    %c0_i32 = arith.constant 0 : i32
    %c0_i32_0 = arith.constant 0 : i32
    %c0_i32_1 = arith.constant 0 : i32
    %c0_i32_2 = arith.constant 0 : i32
    return %c0_i32, %c0_i32_0, %c0_i32_1 : i32, i32, i32
  }
  func.func @transform_9(%arg0: i32) -> (i32, i32, i32) {
    %c0_i32 = arith.constant 0 : i32
    %c0_i32_0 = arith.constant 0 : i32
    %c0_i32_1 = arith.constant 0 : i32
    %c0_i32_2 = arith.constant 0 : i32
    return %c0_i32, %c0_i32_0, %c0_i32_1 : i32, i32, i32
  }
  func.func @transform_10(%arg0: i32) -> (i32, i32) {
    %c0_i32 = arith.constant 0 : i32
    %c0_i32_0 = arith.constant 0 : i32
    %c0_i32_1 = arith.constant 0 : i32
    return %c0_i32, %c0_i32_0 : i32, i32
  }
  func.func @transform_11(%arg0: i32) -> (i32, i32) {
    %c0_i32 = arith.constant 0 : i32
    %c0_i32_0 = arith.constant 0 : i32
    %c0_i32_1 = arith.constant 0 : i32
    return %c0_i32, %c0_i32_0 : i32, i32
  }
}

</mosaic_0001>

<llo_original>
// kernel: ext_gnn_forward.1
$region0: #{ext_gnn_forward.1}
  #allocation0 [shape = 'u32[]', space=smem, size = 0x4, offset = 0x4, fixed_abs, tag = 'smem constant byte address 0x4 - core index']
  #allocation1 [shape = 'u32[72,128]{1,0:T(1,128)}', space=vmem, size = 0x9000, scoped, tag = 'internal scratch']
  #allocation2 [shape = 'f32[136,128]{1,0:T(8,128)}', space=vmem, size = 0x11000, scoped, tag = 'scratch operand']
  %s0 = inlined_call_operand.vmem [shape: f32[8,8], index: 0, kind: input, shape index: {}]
  %s1 = inlined_call_operand.vmem [shape: f32[8,128], index: 1, kind: input, shape index: {}]
  %s2 = inlined_call_operand.vmem [shape: f32[64,128], index: 2, kind: input, shape index: {}]
  %s3 = inlined_call_operand.vmem [shape: f32[64,136], index: 3, kind: input, shape index: {}]
  %s4 = inlined_call_operand.vmem [shape: bf16[2,128,384], index: 4, kind: input, shape index: {}]
  %s5 = inlined_call_operand.vmem [shape: bf16[2,128,384], index: 5, kind: input, shape index: {}]
  %s6 = inlined_call_operand.vmem [shape: f32[2,1,128], index: 6, kind: input, shape index: {}]
  %s7 = inlined_call_operand.vmem [shape: f32[2,1,128], index: 7, kind: input, shape index: {}]
  %s8 = inlined_call_operand.vmem [shape: f32[2,1,128], index: 8, kind: input, shape index: {}]
  %s9 = inlined_call_operand.vmem [shape: f32[2,1,128], index: 9, kind: input, shape index: {}]
  %s10 = inlined_call_operand.hbm [shape: f32[64,128], index: 10, kind: output, shape index: {0}]
  %s11 = inlined_call_operand.hbm [shape: f32[8,128], index: 11, kind: output, shape index: {1}]
  %12 = xla_tuple %s10, %s11
  %s13 = sld [smem:[#allocation0]]
  $region58: #{ext_gnn_forward.1} parent=0
    _
  %s15 = ssub.s32 1, %s13
  %s16 = scalar_select 0, %s15, %s13
  $region1: #{ext_gnn_forward.1} parent=0
    #allocation3 [shape = 'u8[32768]{0}', space=vmem, size = 0x8000, scoped, tag = 'output window, operand 0, single buffered']
    #allocation4 [shape = 's32[1]{0}', space=sflag, size = 0x4, scoped, tag = 'scoped memory for ext_gnn_forward.1']
    #allocation5 [shape = 'u8[4096]{0}', space=vmem, size = 0x1000, scoped, tag = 'output window, operand 1, single buffered']
    #allocation6 [shape = 's32[1]{0}', space=sflag, size = 0x4, scoped, tag = 'scoped memory for ext_gnn_forward.1']
    %17 = vsyncpa [#allocation4], 0
    %18 = vsyncpa [#allocation6], 0
    // Predicated region
    $region2: #{ext_gnn_forward.1} parent=1 // pred_check
      _
    $region3: #{ext_gnn_forward.1} parent=1 // pred_check_branch
      %20 = sbr.rel (0) target = $region5
    $region4: #{ext_gnn_forward.1} parent=1 // pred_region
      _
    $region5: #{ext_gnn_forward.1} parent=1 // pred_fallthru
      _
    // Predicated region
    $region6: #{ext_gnn_forward.1} parent=1 // pred_check
      _
    $region7: #{ext_gnn_forward.1} parent=1 // pred_check_branch
      %22 = sbr.rel (0) target = $region9
    $region8: #{ext_gnn_forward.1} parent=1 // pred_region
      _
    $region9: #{ext_gnn_forward.1} parent=1 // pred_fallthru
      _
    // Predicated region
    $region10: #{ext_gnn_forward.1} parent=1 // pred_check
      _
    $region11: #{ext_gnn_forward.1} parent=1 // pred_check_branch
      %24 = sbr.rel (0) target = $region13
    $region12: #{ext_gnn_forward.1} parent=1 // pred_region
      _
    $region13: #{ext_gnn_forward.1} parent=1 // pred_fallthru
      _
    // Predicated region
    $region14: #{ext_gnn_forward.1} parent=1 // pred_check
      _
    $region15: #{ext_gnn_forward.1} parent=1 // pred_check_branch
      %26 = sbr.rel (0) target = $region17
    $region16: #{ext_gnn_forward.1} parent=1 // pred_region
      _
    $region17: #{ext_gnn_forward.1} parent=1 // pred_fallthru
      _
    // Predicated region
    $region18: #{ext_gnn_forward.1} parent=1 // pred_check
      _
    $region19: #{ext_gnn_forward.1} parent=1 // pred_check_branch
      %28 = sbr.rel (0) target = $region21
    $region20: #{ext_gnn_forward.1} parent=1 // pred_region
      _
    $region21: #{ext_gnn_forward.1} parent=1 // pred_fallthru
      _
    // Predicated region
    $region22: #{ext_gnn_forward.1} parent=1 // pred_check
      _
    $region23: #{ext_gnn_forward.1} parent=1 // pred_check_branch
      %30 = sbr.rel (0) target = $region25
    $region24: #{ext_gnn_forward.1} parent=1 // pred_region
      _
    $region25: #{ext_gnn_forward.1} parent=1 // pred_fallthru
      _
    // Predicated region
    $region26: #{ext_gnn_forward.1} parent=1 // pred_check
      _
    $region27: #{ext_gnn_forward.1} parent=1 // pred_check_branch
      %32 = sbr.rel (0) target = $region29
    $region28: #{ext_gnn_forward.1} parent=1 // pred_region
      _
    $region29: #{ext_gnn_forward.1} parent=1 // pred_fallthru
      _
    // Predicated region
    $region30: #{ext_gnn_forward.1} parent=1 // pred_check
      _
    $region31: #{ext_gnn_forward.1} parent=1 // pred_check_branch
      %34 = sbr.rel (0) target = $region33
    $region32: #{ext_gnn_forward.1} parent=1 // pred_region
      _
    $region33: #{ext_gnn_forward.1} parent=1 // pred_fallthru
      _
    // Predicated region
    $region34: #{ext_gnn_forward.1} parent=1 // pred_check
      _
    $region35: #{ext_gnn_forward.1} parent=1 // pred_check_branch
      %36 = sbr.rel (0) target = $region37
    $region36: #{ext_gnn_forward.1} parent=1 // pred_region
      _
    $region37: #{ext_gnn_forward.1} parent=1 // pred_fallthru
      _
    // Predicated region
    $region38: #{ext_gnn_forward.1} parent=1 // pred_check
      _
    $region39: #{ext_gnn_forward.1} parent=1 // pred_check_branch
      %38 = sbr.rel (0) target = $region41
    $region40: #{ext_gnn_forward.1} parent=1 // pred_region
      _
    $region41: #{ext_gnn_forward.1} parent=1 // pred_fallthru
      _
    %v39 = vld [vmem:[%s0] sm:$0xff]
    %v40 = vld [vmem:[%s1] sm:$0xff]
    %vm41 = vcmask 64512
    %v43 = vsel %vm41, %v39, 0
    %45 = vmatpush.msra.mxu0 0.0
    %46 = vmatpush.msra.mxu0 0.0
    %47 = vmatpush.msra.mxu0 0.0
    %48 = vmatpush.msra.mxu0 0.0
    %49 = vmatpush.msra.mxu0 0.0
    %50 = vmatpush.msra.mxu0 0.0
    %51 = vmatpush.msra.mxu0 0.0
    %52 = vmatpush.msra.mxu0 0.0
    %53 = vmatpush.msra.mxu0 0.0
    %54 = vmatpush.msra.mxu0 0.0
    %55 = vmatpush.msra.mxu0 0.0
    %56 = vmatpush.msra.mxu0 0.0
    %57 = vmatpush.msra.mxu0 0.0
    %58 = vmatpush.msra.mxu0 0.0
    %59 = vmatpush.msra.mxu0 0.0
    %60 = vmatpush.msra.mxu0 %v40
    %61 = vmatmul.f32.gmra.mxu0 %v43
    %v62 = vpop.f32.mrf.mxu0
    %v63 = vadd.f32 0.0, %v62
    %64 = vdwg.mxu0
    %v65 = vld [vmem:[%s2] sm:$0xff]
    %v66 = vld [vmem:[%s2 + $0x8] sm:$0xff]
    %v67 = vld [vmem:[%s2 + $0x10] sm:$0xff]
    %v68 = vld [vmem:[%s2 + $0x18] sm:$0xff]
    %v69 = vld [vmem:[%s2 + $0x20] sm:$0xff]
    %v70 = vld [vmem:[%s2 + $0x28] sm:$0xff]
    %v71 = vld [vmem:[%s2 + $0x30] sm:$0xff]
    %v72 = vld [vmem:[%s2 + $0x38] sm:$0xff]
    %v73 = vld [vmem:[%s3] sm:$0xff]
    %v74 = vld [vmem:[%s3 + $0x8] sm:$0xff]
    %v75 = vld [vmem:[%s3 + $0x10] sm:$0xff]
    %v76 = vld [vmem:[%s3 + $0x18] sm:$0xff]
    %v77 = vld [vmem:[%s3 + $0x20] sm:$0xff]
    %v78 = vld [vmem:[%s3 + $0x28] sm:$0xff]
    %v79 = vld [vmem:[%s3 + $0x30] sm:$0xff]
    %v80 = vld [vmem:[%s3 + $0x38] sm:$0xff]
    %v81 = vld [vmem:[%s3 + $0x40] sm:$0xff]
    %v82 = vld [vmem:[%s3 + $0x48] sm:$0xff]
    %v83 = vld [vmem:[%s3 + $0x50] sm:$0xff]
    %v84 = vld [vmem:[%s3 + $0x58] sm:$0xff]
    %v85 = vld [vmem:[%s3 + $0x60] sm:$0xff]
    %v86 = vld [vmem:[%s3 + $0x68] sm:$0xff]
    %v87 = vld [vmem:[%s3 + $0x70] sm:$0xff]
    %v88 = vld [vmem:[%s3 + $0x78] sm:$0xff]
    %v89 = vlaneseq
    %v90 = vshrl.u32 %v89, 7
    %vm91 = vcmp.lt.s32.totalorder %v90, 4
    %v92 = vld [vmem:[%s4] sm:$0xff]
    %v93 = vld [vmem:[%s4 + $0x8] sm:$0xf]
    %v94 = vld [vmem:[%s4 + $0xc] sm:$0xff]
    %v95 = vld [vmem:[%s4 + $0x14] sm:$0xf]
    %v96 = vld [vmem:[%s4 + $0x18] sm:$0xff]
    %v97 = vld [vmem:[%s4 + $0x20] sm:$0xf]
    %v98 = vld [vmem:[%s4 + $0x24] sm:$0xff]
    %v99 = vld [vmem:[%s4 + $0x2c] sm:$0xf]
    %v100 = vld [vmem:[%s4 + $0x30] sm:$0xff]
    %v101 = vld [vmem:[%s4 + $0x38] sm:$0xf]
    %v102 = vld [vmem:[%s4 + $0x3c] sm:$0xff]
    %v103 = vld [vmem:[%s4 + $0x44] sm:$0xf]
    %v104 = vld [vmem:[%s4 + $0x48] sm:$0xff]
    %v105 = vld [vmem:[%s4 + $0x50] sm:$0xf]
    %v106 = vld [vmem:[%s4 + $0x54] sm:$0xff]
    %v107 = vld [vmem:[%s4 + $0x5c] sm:$0xf]
    %v108 = vld [vmem:[%s4 + $0x60] sm:$0xff]
    %v109 = vld [vmem:[%s4 + $0x68] sm:$0xf]
    %v110 = vld [vmem:[%s4 + $0x6c] sm:$0xff]
    %v111 = vld [vmem:[%s4 + $0x74] sm:$0xf]
    %v112 = vld [vmem:[%s4 + $0x78] sm:$0xff]
    %v113 = vld [vmem:[%s4 + $0x80] sm:$0xf]
    %v114 = vld [vmem:[%s4 + $0x84] sm:$0xff]
    %v115 = vld [vmem:[%s4 + $0x8c] sm:$0xf]
    %v116 = vld [vmem:[%s4 + $0x90] sm:$0xff]
    %v117 = vld [vmem:[%s4 + $0x98] sm:$0xf]
    %v118 = vld [vmem:[%s4 + $0x9c] sm:$0xff]
    %v119 = vld [vmem:[%s4 + $0xa4] sm:$0xf]
    %v120 = vld [vmem:[%s4 + $0xa8] sm:$0xff]
    %v121 = vld [vmem:[%s4 + $0xb0] sm:$0xf]
    %v122 = vld [vmem:[%s4 + $0xb4] sm:$0xff]
    %v123 = vld [vmem:[%s4 + $0xbc] sm:$0xf]
    %v124 = vpack.c.bf16 %v63, %v63
    %v157 = vunpack.c.l.b16 %v92
    %v158 = vunpack.c.h.b16 %v92
    %v159 = vunpack.c.l.b16 %v93
    %v160 = vunpack.c.l.b16 %v94
    %v161 = vunpack.c.h.b16 %v94
    %v162 = vunpack.c.l.b16 %v95
    %v163 = vunpack.c.l.b16 %v96
    %v164 = vunpack.c.h.b16 %v96
    %v165 = vunpack.c.l.b16 %v97
    %v166 = vunpack.c.l.b16 %v98
    %v167 = vunpack.c.h.b16 %v98
    %v168 = vunpack.c.l.b16 %v99
    %v169 = vunpack.c.l.b16 %v100
    %v170 = vunpack.c.h.b16 %v100
    %v171 = vunpack.c.l.b16 %v101
    %v172 = vunpack.c.l.b16 %v102
    %v173 = vunpack.c.h.b16 %v102
    %v174 = vunpack.c.l.b16 %v103
    %v175 = vunpack.c.l.b16 %v104
    %v176 = vunpack.c.h.b16 %v104
    %v177 = vunpack.c.l.b16 %v105
    %v178 = vunpack.c.l.b16 %v106
    %v179 = vunpack.c.h.b16 %v106
    %v180 = vunpack.c.l.b16 %v107
    %v181 = vunpack.c.l.b16 %v108
    %v182 = vunpack.c.h.b16 %v108
    %v183 = vunpack.c.l.b16 %v109
    %v184 = vunpack.c.l.b16 %v110
    %v185 = vunpack.c.h.b16 %v110
    %v186 = vunpack.c.l.b16 %v111
    %v187 = vunpack.c.l.b16 %v112
    %v188 = vunpack.c.h.b16 %v112
    %v189 = vunpack.c.l.b16 %v113
    %v190 = vunpack.c.l.b16 %v114
    %v191 = vunpack.c.h.b16 %v114
    %v192 = vunpack.c.l.b16 %v115
    %v193 = vunpack.c.l.b16 %v116
    %v194 = vunpack.c.h.b16 %v116
    %v195 = vunpack.c.l.b16 %v117
    %v196 = vunpack.c.l.b16 %v118
    %v197 = vunpack.c.h.b16 %v118
    %v198 = vunpack.c.l.b16 %v119
    %v199 = vunpack.c.l.b16 %v120
    %v200 = vunpack.c.h.b16 %v120
    %v201 = vunpack.c.l.b16 %v121
    %v202 = vunpack.c.l.b16 %v122
    %v203 = vunpack.c.h.b16 %v122
    %v204 = vunpack.c.l.b16 %v123
    %v205 = vpack.c.b16 %v160, %v157
    %v206 = vpack.c.b16 %v161, %v158
    %v207 = vpack.c.b16 %v162, %v159
    %v208 = vpack.c.b16 %v166, %v163
    %v209 = vpack.c.b16 %v167, %v164
    %v210 = vpack.c.b16 %v168, %v165
    %v211 = vpack.c.b16 %v172, %v169
    %v212 = vpack.c.b16 %v173, %v170
    %v213 = vpack.c.b16 %v174, %v171
    %v214 = vpack.c.b16 %v178, %v175
    %v215 = vpack.c.b16 %v179, %v176
    %v216 = vpack.c.b16 %v180, %v177
    %v217 = vpack.c.b16 %v184, %v181
    %v218 = vpack.c.b16 %v185, %v182
    %v219 = vpack.c.b16 %v186, %v183
    %v220 = vpack.c.b16 %v190, %v187
    %v221 = vpack.c.b16 %v191, %v188
    %v222 = vpack.c.b16 %v192, %v189
    %v223 = vpack.c.b16 %v196, %v193
    %v224 = vpack.c.b16 %v197, %v194
    %v225 = vpack.c.b16 %v198, %v195
    %v226 = vpack.c.b16 %v202, %v199
    %v227 = vpack.c.b16 %v203, %v200
    %v228 = vpack.c.b16 %v204, %v201
    %253 = vmatpush.bf16.msra.mxu0 %v226
    %254 = vmatpush.bf16.msra.mxu0 %v223
    %255 = vmatpush.bf16.msra.mxu0 %v220
    %256 = vmatpush.bf16.msra.mxu0 %v217
    %257 = vmatpush.bf16.msra.mxu0 %v214
    %258 = vmatpush.bf16.msra.mxu0 %v211
    %259 = vmatpush.bf16.msra.mxu0 %v208
    %260 = vmatpush.bf16.msra.mxu0 %v205
    %261 = vmatmul.bf16.gmra.mxu0 %v124
    %v262 = vpop.f32.mrf.mxu0
    %v263 = vadd.f32 0.0, %v262
    %v264 = vpop.f32.mrf.mxu0
    %265 = vdwg.mxu0
    %266 = vmatpush.bf16.msra.mxu0 %v227
    %267 = vmatpush.bf16.msra.mxu0 %v224
    %268 = vmatpush.bf16.msra.mxu0 %v221
    %269 = vmatpush.bf16.msra.mxu0 %v218
    %270 = vmatpush.bf16.msra.mxu0 %v215
    %271 = vmatpush.bf16.msra.mxu0 %v212
    %272 = vmatpush.bf16.msra.mxu0 %v209
    %273 = vmatpush.bf16.msra.mxu0 %v206
    %274 = vmatmul.bf16.gmra.mxu0 %v124
    %v275 = vpop.f32.mrf.mxu0
    %v276 = vadd.f32 0.0, %v275
    %v277 = vpop.f32.mrf.mxu0
    %278 = vdwg.mxu0
    %279 = vmatpush.bf16.msra.mxu0 %v228
    %280 = vmatpush.bf16.msra.mxu0 %v225
    %281 = vmatpush.bf16.msra.mxu0 %v222
    %282 = vmatpush.bf16.msra.mxu0 %v219
    %283 = vmatpush.bf16.msra.mxu0 %v216
    %284 = vmatpush.bf16.msra.mxu0 %v213
    %285 = vmatpush.bf16.msra.mxu0 %v210
    %286 = vmatpush.bf16.msra.mxu0 %v207
    %287 = vmatmul.bf16.gmra.mxu0 %v124
    %v288 = vpop.f32.mrf.mxu0
    %v289 = vadd.f32 0.0, %v288
    %v290 = vpop.f32.mrf.mxu0
    %291 = vdwg.mxu0
    %v292 = vld [vmem:[%s6] sm:$0x1]
    %v294 = vperm.slane %v292, 0
    %v296 = vadd.f32 %v263, %v294
    %v297 = vld [vmem:[%s7] sm:$0x1]
    %v299 = vperm.slane %v297, 0
    %v301 = vadd.f32 %v276, %v299
    %v302 = vsel %vm91, %v296, %v301
    %v303 = vld [vmem:[%s9] sm:$0x1]
    %v305 = vperm.slane %v303, 0
    %v307 = vadd.f32 %v289, %v305
    %v308 = vld [vmem:[%s5] sm:$0xff]
    %v309 = vld [vmem:[%s5 + $0x8] sm:$0xf]
    %v310 = vld [vmem:[%s5 + $0xc] sm:$0xff]
    %v311 = vld [vmem:[%s5 + $0x14] sm:$0xf]
    %v312 = vld [vmem:[%s5 + $0x18] sm:$0xff]
    %v313 = vld [vmem:[%s5 + $0x20] sm:$0xf]
    %v314 = vld [vmem:[%s5 + $0x24] sm:$0xff]
    %v315 = vld [vmem:[%s5 + $0x2c] sm:$0xf]
    %v316 = vld [vmem:[%s5 + $0x30] sm:$0xff]
    %v317 = vld [vmem:[%s5 + $0x38] sm:$0xf]
    %v318 = vld [vmem:[%s5 + $0x3c] sm:$0xff]
    %v319 = vld [vmem:[%s5 + $0x44] sm:$0xf]
    %v320 = vld [vmem:[%s5 + $0x48] sm:$0xff]
    %v321 = vld [vmem:[%s5 + $0x50] sm:$0xf]
    %v322 = vld [vmem:[%s5 + $0x54] sm:$0xff]
    %v323 = vld [vmem:[%s5 + $0x5c] sm:$0xf]
    %v324 = vld [vmem:[%s5 + $0x60] sm:$0xff]
    %v325 = vld [vmem:[%s5 + $0x68] sm:$0xf]
    %v326 = vld [vmem:[%s5 + $0x6c] sm:$0xff]
    %v327 = vld [vmem:[%s5 + $0x74] sm:$0xf]
    %v328 = vld [vmem:[%s5 + $0x78] sm:$0xff]
    %v329 = vld [vmem:[%s5 + $0x80] sm:$0xf]
    %v330 = vld [vmem:[%s5 + $0x84] sm:$0xff]
    %v331 = vld [vmem:[%s5 + $0x8c] sm:$0xf]
    %v332 = vld [vmem:[%s5 + $0x90] sm:$0xff]
    %v333 = vld [vmem:[%s5 + $0x98] sm:$0xf]
    %v334 = vld [vmem:[%s5 + $0x9c] sm:$0xff]
    %v335 = vld [vmem:[%s5 + $0xa4] sm:$0xf]
    %v336 = vld [vmem:[%s5 + $0xa8] sm:$0xff]
    %v337 = vld [vmem:[%s5 + $0xb0] sm:$0xf]
    %v338 = vld [vmem:[%s5 + $0xb4] sm:$0xff]
    %v339 = vld [vmem:[%s5 + $0xbc] sm:$0xf]
    %v340 = vpack.c.bf16 %v66, %v65
    %v341 = vpack.c.bf16 %v68, %v67
    %v342 = vpack.c.bf16 %v70, %v69
    %v343 = vpack.c.bf16 %v72, %v71
    %v376 = vunpack.c.l.b16 %v308
    %v377 = vunpack.c.h.b16 %v308
    %v378 = vunpack.c.l.b16 %v309
    %v379 = vunpack.c.l.b16 %v310
    %v380 = vunpack.c.h.b16 %v310
    %v381 = vunpack.c.l.b16 %v311
    %v382 = vunpack.c.l.b16 %v312
    %v383 = vunpack.c.h.b16 %v312
    %v384 = vunpack.c.l.b16 %v313
    %v385 = vunpack.c.l.b16 %v314
    %v386 = vunpack.c.h.b16 %v314
    %v387 = vunpack.c.l.b16 %v315
    %v388 = vunpack.c.l.b16 %v316
    %v389 = vunpack.c.h.b16 %v316
    %v390 = vunpack.c.l.b16 %v317
    %v391 = vunpack.c.l.b16 %v318
    %v392 = vunpack.c.h.b16 %v318
    %v393 = vunpack.c.l.b16 %v319
    %v394 = vunpack.c.l.b16 %v320
    %v395 = vunpack.c.h.b16 %v320
    %v396 = vunpack.c.l.b16 %v321
    %v397 = vunpack.c.l.b16 %v322
    %v398 = vunpack.c.h.b16 %v322
    %v399 = vunpack.c.l.b16 %v323
    %v400 = vunpack.c.l.b16 %v324
    %v401 = vunpack.c.h.b16 %v324
    %v402 = vunpack.c.l.b16 %v325
    %v403 = vunpack.c.l.b16 %v326
    %v404 = vunpack.c.h.b16 %v326
    %v405 = vunpack.c.l.b16 %v327
    %v406 = vunpack.c.l.b16 %v328
    %v407 = vunpack.c.h.b16 %v328
    %v408 = vunpack.c.l.b16 %v329
    %v409 = vunpack.c.l.b16 %v330
    %v410 = vunpack.c.h.b16 %v330
    %v411 = vunpack.c.l.b16 %v331
    %v412 = vunpack.c.l.b16 %v332
    %v413 = vunpack.c.h.b16 %v332
    %v414 = vunpack.c.l.b16 %v333
    %v415 = vunpack.c.l.b16 %v334
    %v416 = vunpack.c.h.b16 %v334
    %v417 = vunpack.c.l.b16 %v335
    %v418 = vunpack.c.l.b16 %v336
    %v419 = vunpack.c.h.b16 %v336
    %v420 = vunpack.c.l.b16 %v337
    %v421 = vunpack.c.l.b16 %v338
    %v422 = vunpack.c.h.b16 %v338
    %v423 = vunpack.c.l.b16 %v339
    %v424 = vpack.c.b16 %v379, %v376
    %v425 = vpack.c.b16 %v380, %v377
    %v426 = vpack.c.b16 %v381, %v378
    %v427 = vpack.c.b16 %v385, %v382
    %v428 = vpack.c.b16 %v386, %v383
    %v429 = vpack.c.b16 %v387, %v384
    %v430 = vpack.c.b16 %v391, %v388
    %v431 = vpack.c.b16 %v392, %v389
    %v432 = vpack.c.b16 %v393, %v390
    %v433 = vpack.c.b16 %v397, %v394
    %v434 = vpack.c.b16 %v398, %v395
    %v435 = vpack.c.b16 %v399, %v396
    %v436 = vpack.c.b16 %v403, %v400
    %v437 = vpack.c.b16 %v404, %v401
    %v438 = vpack.c.b16 %v405, %v402
    %v439 = vpack.c.b16 %v409, %v406
    %v440 = vpack.c.b16 %v410, %v407
    %v441 = vpack.c.b16 %v411, %v408
    %v442 = vpack.c.b16 %v415, %v412
    %v443 = vpack.c.b16 %v416, %v413
    %v444 = vpack.c.b16 %v417, %v414
    %v445 = vpack.c.b16 %v421, %v418
    %v446 = vpack.c.b16 %v422, %v419
    %v447 = vpack.c.b16 %v423, %v420
    %472 = vmatpush.bf16.msra.mxu0 %v445
    %473 = vmatpush.bf16.msra.mxu0 %v442
    %474 = vmatpush.bf16.msra.mxu0 %v439
    %475 = vmatpush.bf16.msra.mxu0 %v436
    %476 = vmatpush.bf16.msra.mxu0 %v433
    %477 = vmatpush.bf16.msra.mxu0 %v430
    %478 = vmatpush.bf16.msra.mxu0 %v427
    %479 = vmatpush.bf16.msra.mxu0 %v424
    %480 = vmatmul.bf16.gmra.mxu0 %v340
    %v481 = vpop.f32.mrf.mxu0
    %v482 = vadd.f32 0.0, %v481
    %v483 = vpop.f32.mrf.mxu0
    %v484 = vadd.f32 0.0, %v483
    %485 = vmatmul.bf16.gmra.mxu0 %v341
    %v486 = vpop.f32.mrf.mxu0
    %v487 = vadd.f32 0.0, %v486
    %v488 = vpop.f32.mrf.mxu0
    %v489 = vadd.f32 0.0, %v488
    %490 = vmatmul.bf16.gmra.mxu0 %v342
    %v491 = vpop.f32.mrf.mxu0
    %v492 = vadd.f32 0.0, %v491
    %v493 = vpop.f32.mrf.mxu0
    %v494 = vadd.f32 0.0, %v493
    %495 = vmatmul.bf16.gmra.mxu0 %v343
    %v496 = vpop.f32.mrf.mxu0
    %v497 = vadd.f32 0.0, %v496
    %v498 = vpop.f32.mrf.mxu0
    %v499 = vadd.f32 0.0, %v498
    %500 = vdwg.mxu0
    %501 = vmatpush.bf16.msra.mxu0 %v446
    %502 = vmatpush.bf16.msra.mxu0 %v443
    %503 = vmatpush.bf16.msra.mxu0 %v440
    %504 = vmatpush.bf16.msra.mxu0 %v437
    %505 = vmatpush.bf16.msra.mxu0 %v434
    %506 = vmatpush.bf16.msra.mxu0 %v431
    %507 = vmatpush.bf16.msra.mxu0 %v428
    %508 = vmatpush.bf16.msra.mxu0 %v425
    %509 = vmatmul.bf16.gmra.mxu0 %v340
    %v510 = vpop.f32.mrf.mxu0
    %v511 = vadd.f32 0.0, %v510
    %v512 = vpop.f32.mrf.mxu0
    %v513 = vadd.f32 0.0, %v512
    %514 = vmatmul.bf16.gmra.mxu0 %v341
    %v515 = vpop.f32.mrf.mxu0
    %v516 = vadd.f32 0.0, %v515
    %v517 = vpop.f32.mrf.mxu0
    %v518 = vadd.f32 0.0, %v517
    %519 = vmatmul.bf16.gmra.mxu0 %v342
    %v520 = vpop.f32.mrf.mxu0
    %v521 = vadd.f32 0.0, %v520
    %v522 = vpop.f32.mrf.mxu0
    %v523 = vadd.f32 0.0, %v522
    %524 = vmatmul.bf16.gmra.mxu0 %v343
    %v525 = vpop.f32.mrf.mxu0
    %v526 = vadd.f32 0.0, %v525
    %v527 = vpop.f32.mrf.mxu0
    %v528 = vadd.f32 0.0, %v527
    %529 = vdwg.mxu0
    %530 = vmatpush.bf16.msra.mxu0 %v447
    %531 = vmatpush.bf16.msra.mxu0 %v444
    %532 = vmatpush.bf16.msra.mxu0 %v441
    %533 = vmatpush.bf16.msra.mxu0 %v438
    %534 = vmatpush.bf16.msra.mxu0 %v435
    %535 = vmatpush.bf16.msra.mxu0 %v432
    %536 = vmatpush.bf16.msra.mxu0 %v429
    %537 = vmatpush.bf16.msra.mxu0 %v426
    %538 = vmatmul.bf16.gmra.mxu0 %v340
    %v539 = vpop.f32.mrf.mxu0
    %v540 = vadd.f32 0.0, %v539
    %v541 = vpop.f32.mrf.mxu0
    %v542 = vadd.f32 0.0, %v541
    %543 = vmatmul.bf16.gmra.mxu0 %v341
    %v544 = vpop.f32.mrf.mxu0
    %v545 = vadd.f32 0.0, %v544
    %v546 = vpop.f32.mrf.mxu0
    %v547 = vadd.f32 0.0, %v546
    %548 = vmatmul.bf16.gmra.mxu0 %v342
    %v549 = vpop.f32.mrf.mxu0
    %v550 = vadd.f32 0.0, %v549
    %v551 = vpop.f32.mrf.mxu0
    %v552 = vadd.f32 0.0, %v551
    %553 = vmatmul.bf16.gmra.mxu0 %v343
    %v554 = vpop.f32.mrf.mxu0
    %v555 = vadd.f32 0.0, %v554
    %v556 = vpop.f32.mrf.mxu0
    %v557 = vadd.f32 0.0, %v556
    %558 = vdwg.mxu0
    %559 = vst [vmem:[#allocation2] sm:$0xff] %v302
    %560 = vst [vmem:[#allocation2 + $0x8] sm:$0xff] %v482
    %561 = vst [vmem:[#allocation2 + $0x10] sm:$0xff] %v484
    %562 = vst [vmem:[#allocation2 + $0x18] sm:$0xff] %v487
    %563 = vst [vmem:[#allocation2 + $0x20] sm:$0xff] %v489
    %564 = vst [vmem:[#allocation2 + $0x28] sm:$0xff] %v492
    %565 = vst [vmem:[#allocation2 + $0x30] sm:$0xff] %v494
    %566 = vst [vmem:[#allocation2 + $0x38] sm:$0xff] %v497
    %567 = vst [vmem:[#allocation2 + $0x40] sm:$0xff] %v499
    %568 = vst [vmem:[#allocation2 + $0x48] sm:$0xff] %v511
    %569 = vst [vmem:[#allocation2 + $0x50] sm:$0xff] %v513
    %570 = vst [vmem:[#allocation2 + $0x58] sm:$0xff] %v516
    %571 = vst [vmem:[#allocation2 + $0x60] sm:$0xff] %v518
    %572 = vst [vmem:[#allocation2 + $0x68] sm:$0xff] %v521
    %573 = vst [vmem:[#allocation2 + $0x70] sm:$0xff] %v523
    %574 = vst [vmem:[#allocation2 + $0x78] sm:$0xff] %v526
    %575 = vst [vmem:[#allocation2 + $0x80] sm:$0xff] %v528
    %v576 = vld [vmem:[#allocation2] sm:$0xff]
    %v577 = vld [vmem:[#allocation2 + $0x8] sm:$0xff]
    %v578 = vld [vmem:[#allocation2 + $0x10] sm:$0xff]
    %v579 = vld [vmem:[#allocation2 + $0x18] sm:$0xff]
    %v580 = vld [vmem:[#allocation2 + $0x20] sm:$0xff]
    %v581 = vld [vmem:[#allocation2 + $0x28] sm:$0xff]
    %v582 = vld [vmem:[#allocation2 + $0x30] sm:$0xff]
    %v583 = vld [vmem:[#allocation2 + $0x38] sm:$0xff]
    %v584 = vld [vmem:[#allocation2 + $0x40] sm:$0xff]
    %v585 = vld [vmem:[#allocation2 + $0x48] sm:$0xff]
    %v586 = vld [vmem:[#allocation2 + $0x50] sm:$0xff]
    %v587 = vld [vmem:[#allocation2 + $0x58] sm:$0xff]
    %v588 = vld [vmem:[#allocation2 + $0x60] sm:$0xff]
    %v589 = vld [vmem:[#allocation2 + $0x68] sm:$0xff]
    %v590 = vld [vmem:[#allocation2 + $0x70] sm:$0xff]
    %v591 = vld [vmem:[#allocation2 + $0x78] sm:$0xff]
    %v592 = vld [vmem:[#allocation2 + $0x80] sm:$0xff]
    %v594 = vsel %vm41, %v74, 0
    %v597 = vsel %vm41, %v76, 0
    %v600 = vsel %vm41, %v78, 0
    %v603 = vsel %vm41, %v80, 0
    %v606 = vsel %vm41, %v82, 0
    %v609 = vsel %vm41, %v84, 0
    %v612 = vsel %vm41, %v86, 0
    %v615 = vsel %vm41, %v88, 0
    %617 = vmatpush.msra.mxu0 %v591
    %618 = vmatpush.msra.mxu0 %v590
    %619 = vmatpush.msra.mxu0 %v589
    %620 = vmatpush.msra.mxu0 %v588
    %621 = vmatpush.msra.mxu0 %v587
    %622 = vmatpush.msra.mxu0 %v586
    %623 = vmatpush.msra.mxu0 %v585
    %624 = vmatpush.msra.mxu0 %v584
    %625 = vmatpush.msra.mxu0 %v583
    %626 = vmatpush.msra.mxu0 %v582
    %627 = vmatpush.msra.mxu0 %v581
    %628 = vmatpush.msra.mxu0 %v580
    %629 = vmatpush.msra.mxu0 %v579
    %630 = vmatpush.msra.mxu0 %v578
    %631 = vmatpush.msra.mxu0 %v577
    %632 = vmatpush.msra.mxu0 %v576
    %633 = vmatmul.f32.gmra.mxu0 %v73
    %v634 = vpop.f32.mrf.mxu0
    %v635 = vadd.f32 0.0, %v634
    %636 = vmatmul.f32.gmra.mxu0 %v75
    %v637 = vpop.f32.mrf.mxu0
    %v638 = vadd.f32 0.0, %v637
    %639 = vmatmul.f32.gmra.mxu0 %v77
    %v640 = vpop.f32.mrf.mxu0
    %v641 = vadd.f32 0.0, %v640
    %642 = vmatmul.f32.gmra.mxu0 %v79
    %v643 = vpop.f32.mrf.mxu0
    %v644 = vadd.f32 0.0, %v643
    %645 = vmatmul.f32.gmra.mxu0 %v81
    %v646 = vpop.f32.mrf.mxu0
    %v647 = vadd.f32 0.0, %v646
    %648 = vmatmul.f32.gmra.mxu0 %v83
    %v649 = vpop.f32.mrf.mxu0
    %v650 = vadd.f32 0.0, %v649
    %651 = vmatmul.f32.gmra.mxu0 %v85
    %v652 = vpop.f32.mrf.mxu0
    %v653 = vadd.f32 0.0, %v652
    %654 = vmatmul.f32.gmra.mxu0 %v87
    %v655 = vpop.f32.mrf.mxu0
    %v656 = vadd.f32 0.0, %v655
    %657 = vdwg.mxu0
    %658 = vmatpush.msra.mxu0 0.0
    %659 = vmatpush.msra.mxu0 0.0
    %660 = vmatpush.msra.mxu0 0.0
    %661 = vmatpush.msra.mxu0 0.0
    %662 = vmatpush.msra.mxu0 0.0
    %663 = vmatpush.msra.mxu0 0.0
    %664 = vmatpush.msra.mxu0 0.0
    %665 = vmatpush.msra.mxu0 0.0
    %666 = vmatpush.msra.mxu0 0.0
    %667 = vmatpush.msra.mxu0 0.0
    %668 = vmatpush.msra.mxu0 0.0
    %669 = vmatpush.msra.mxu0 0.0
    %670 = vmatpush.msra.mxu0 0.0
    %671 = vmatpush.msra.mxu0 0.0
    %672 = vmatpush.msra.mxu0 0.0
    %673 = vmatpush.msra.mxu0 %v592
    %674 = vmatmul.f32.gmra.mxu0 %v594
    %v675 = vpop.f32.mrf.mxu0
    %v676 = vadd.f32 %v635, %v675
    %677 = vmatmul.f32.gmra.mxu0 %v597
    %v678 = vpop.f32.mrf.mxu0
    %v679 = vadd.f32 %v638, %v678
    %680 = vmatmul.f32.gmra.mxu0 %v600
    %v681 = vpop.f32.mrf.mxu0
    %v682 = vadd.f32 %v641, %v681
    %683 = vmatmul.f32.gmra.mxu0 %v603
    %v684 = vpop.f32.mrf.mxu0
    %v685 = vadd.f32 %v644, %v684
    %686 = vmatmul.f32.gmra.mxu0 %v606
    %v687 = vpop.f32.mrf.mxu0
    %v688 = vadd.f32 %v647, %v687
    %689 = vmatmul.f32.gmra.mxu0 %v609
    %v690 = vpop.f32.mrf.mxu0
    %v691 = vadd.f32 %v650, %v690
    %692 = vmatmul.f32.gmra.mxu0 %v612
    %v693 = vpop.f32.mrf.mxu0
    %v694 = vadd.f32 %v653, %v693
    %695 = vmatmul.f32.gmra.mxu0 %v615
    %v696 = vpop.f32.mrf.mxu0
    %v697 = vadd.f32 %v656, %v696
    %698 = vdwg.mxu0
    %v699 = vld [vmem:[%s8] sm:$0x1]
    %v701 = vperm.slane %v699, 0
    %v703 = vadd.f32 %v540, %v701
    %v704 = vadd.f32 %v542, %v701
    %v705 = vadd.f32 %v545, %v701
    %v706 = vadd.f32 %v547, %v701
    %v707 = vadd.f32 %v550, %v701
    %v708 = vadd.f32 %v552, %v701
    %v709 = vadd.f32 %v555, %v701
    %v710 = vadd.f32 %v557, %v701
    %v711 = vadd.f32 %v703, %v676
    %v712 = vadd.f32 %v704, %v679
    %v713 = vadd.f32 %v705, %v682
    %v714 = vadd.f32 %v706, %v685
    %v715 = vadd.f32 %v707, %v688
    %v716 = vadd.f32 %v708, %v691
    %v717 = vadd.f32 %v709, %v694
    %v718 = vadd.f32 %v710, %v697
    %v719 = vmax.f32 %v711, 0.0
    %v720 = vmax.f32 %v712, 0.0
    %v721 = vmax.f32 %v713, 0.0
    %v722 = vmax.f32 %v714, 0.0
    %v723 = vmax.f32 %v715, 0.0
    %v724 = vmax.f32 %v716, 0.0
    %v725 = vmax.f32 %v717, 0.0
    %v726 = vmax.f32 %v718, 0.0
    %v727 = vmax.f32 %v307, 0.0
    %s728 = scalar_lea.vmem %s4, 192
    %v729 = vld [vmem:[%s728] sm:$0xff]
    %v730 = vld [vmem:[%s728 + $0x8] sm:$0xf]
    %v731 = vld [vmem:[%s728 + $0xc] sm:$0xff]
    %v732 = vld [vmem:[%s728 + $0x14] sm:$0xf]
    %v733 = vld [vmem:[%s728 + $0x18] sm:$0xff]
    %v734 = vld [vmem:[%s728 + $0x20] sm:$0xf]
    %v735 = vld [vmem:[%s728 + $0x24] sm:$0xff]
    %v736 = vld [vmem:[%s728 + $0x2c] sm:$0xf]
    %v737 = vld [vmem:[%s728 + $0x30] sm:$0xff]
    %v738 = vld [vmem:[%s728 + $0x38] sm:$0xf]
    %v739 = vld [vmem:[%s728 + $0x3c] sm:$0xff]
    %v740 = vld [vmem:[%s728 + $0x44] sm:$0xf]
    %v741 = vld [vmem:[%s728 + $0x48] sm:$0xff]
    %v742 = vld [vmem:[%s728 + $0x50] sm:$0xf]
    %v743 = vld [vmem:[%s728 + $0x54] sm:$0xff]
    %v744 = vld [vmem:[%s728 + $0x5c] sm:$0xf]
    %v745 = vld [vmem:[%s728 + $0x60] sm:$0xff]
    %v746 = vld [vmem:[%s728 + $0x68] sm:$0xf]
    %v747 = vld [vmem:[%s728 + $0x6c] sm:$0xff]
    %v748 = vld [vmem:[%s728 + $0x74] sm:$0xf]
    %v749 = vld [vmem:[%s728 + $0x78] sm:$0xff]
    %v750 = vld [vmem:[%s728 + $0x80] sm:$0xf]
    %v751 = vld [vmem:[%s728 + $0x84] sm:$0xff]
    %v752 = vld [vmem:[%s728 + $0x8c] sm:$0xf]
    %v753 = vld [vmem:[%s728 + $0x90] sm:$0xff]
    %v754 = vld [vmem:[%s728 + $0x98] sm:$0xf]
    %v755 = vld [vmem:[%s728 + $0x9c] sm:$0xff]
    %v756 = vld [vmem:[%s728 + $0xa4] sm:$0xf]
    %v757 = vld [vmem:[%s728 + $0xa8] sm:$0xff]
    %v758 = vld [vmem:[%s728 + $0xb0] sm:$0xf]
    %v759 = vld [vmem:[%s728 + $0xb4] sm:$0xff]
    %v760 = vld [vmem:[%s728 + $0xbc] sm:$0xf]
    %v761 = vpack.c.bf16 %v727, %v727
    %v794 = vunpack.c.l.b16 %v729
    %v795 = vunpack.c.h.b16 %v729
    %v796 = vunpack.c.l.b16 %v730
    %v797 = vunpack.c.l.b16 %v731
    %v798 = vunpack.c.h.b16 %v731
    %v799 = vunpack.c.l.b16 %v732
    %v800 = vunpack.c.l.b16 %v733
    %v801 = vunpack.c.h.b16 %v733
    %v802 = vunpack.c.l.b16 %v734
    %v803 = vunpack.c.l.b16 %v735
    %v804 = vunpack.c.h.b16 %v735
    %v805 = vunpack.c.l.b16 %v736
    %v806 = vunpack.c.l.b16 %v737
    %v807 = vunpack.c.h.b16 %v737
    %v808 = vunpack.c.l.b16 %v738
    %v809 = vunpack.c.l.b16 %v739
    %v810 = vunpack.c.h.b16 %v739
    %v811 = vunpack.c.l.b16 %v740
    %v812 = vunpack.c.l.b16 %v741
    %v813 = vunpack.c.h.b16 %v741
    %v814 = vunpack.c.l.b16 %v742
    %v815 = vunpack.c.l.b16 %v743
    %v816 = vunpack.c.h.b16 %v743
    %v817 = vunpack.c.l.b16 %v744
    %v818 = vunpack.c.l.b16 %v745
    %v819 = vunpack.c.h.b16 %v745
    %v820 = vunpack.c.l.b16 %v746
    %v821 = vunpack.c.l.b16 %v747
    %v822 = vunpack.c.h.b16 %v747
    %v823 = vunpack.c.l.b16 %v748
    %v824 = vunpack.c.l.b16 %v749
    %v825 = vunpack.c.h.b16 %v749
    %v826 = vunpack.c.l.b16 %v750
    %v827 = vunpack.c.l.b16 %v751
    %v828 = vunpack.c.h.b16 %v751
    %v829 = vunpack.c.l.b16 %v752
    %v830 = vunpack.c.l.b16 %v753
    %v831 = vunpack.c.h.b16 %v753
    %v832 = vunpack.c.l.b16 %v754
    %v833 = vunpack.c.l.b16 %v755
    %v834 = vunpack.c.h.b16 %v755
    %v835 = vunpack.c.l.b16 %v756
    %v836 = vunpack.c.l.b16 %v757
    %v837 = vunpack.c.h.b16 %v757
    %v838 = vunpack.c.l.b16 %v758
    %v839 = vunpack.c.l.b16 %v759
    %v840 = vunpack.c.h.b16 %v759
    %v841 = vunpack.c.l.b16 %v760
    %v842 = vpack.c.b16 %v797, %v794
    %v843 = vpack.c.b16 %v798, %v795
    %v844 = vpack.c.b16 %v799, %v796
    %v845 = vpack.c.b16 %v803, %v800
    %v846 = vpack.c.b16 %v804, %v801
    %v847 = vpack.c.b16 %v805, %v802
    %v848 = vpack.c.b16 %v809, %v806
    %v849 = vpack.c.b16 %v810, %v807
    %v850 = vpack.c.b16 %v811, %v808
    %v851 = vpack.c.b16 %v815, %v812
    %v852 = vpack.c.b16 %v816, %v813
    %v853 = vpack.c.b16 %v817, %v814
    %v854 = vpack.c.b16 %v821, %v818
    %v855 = vpack.c.b16 %v822, %v819
    %v856 = vpack.c.b16 %v823, %v820
    %v857 = vpack.c.b16 %v827, %v824
    %v858 = vpack.c.b16 %v828, %v825
    %v859 = vpack.c.b16 %v829, %v826
    %v860 = vpack.c.b16 %v833, %v830
    %v861 = vpack.c.b16 %v834, %v831
    %v862 = vpack.c.b16 %v835, %v832
    %v863 = vpack.c.b16 %v839, %v836
    %v864 = vpack.c.b16 %v840, %v837
    %v865 = vpack.c.b16 %v841, %v838
    %890 = vmatpush.bf16.msra.mxu0 %v863
    %891 = vmatpush.bf16.msra.mxu0 %v860
    %892 = vmatpush.bf16.msra.mxu0 %v857
    %893 = vmatpush.bf16.msra.mxu0 %v854
    %894 = vmatpush.bf16.msra.mxu0 %v851
    %895 = vmatpush.bf16.msra.mxu0 %v848
    %896 = vmatpush.bf16.msra.mxu0 %v845
    %897 = vmatpush.bf16.msra.mxu0 %v842
    %898 = vmatmul.bf16.gmra.mxu0 %v761
    %v899 = vpop.f32.mrf.mxu0
    %v900 = vadd.f32 0.0, %v899
    %v901 = vpop.f32.mrf.mxu0
    %902 = vdwg.mxu0
    %903 = vmatpush.bf16.msra.mxu0 %v864
    %904 = vmatpush.bf16.msra.mxu0 %v861
    %905 = vmatpush.bf16.msra.mxu0 %v858
    %906 = vmatpush.bf16.msra.mxu0 %v855
    %907 = vmatpush.bf16.msra.mxu0 %v852
    %908 = vmatpush.bf16.msra.mxu0 %v849
    %909 = vmatpush.bf16.msra.mxu0 %v846
    %910 = vmatpush.bf16.msra.mxu0 %v843
    %911 = vmatmul.bf16.gmra.mxu0 %v761
    %v912 = vpop.f32.mrf.mxu0
    %v913 = vadd.f32 0.0, %v912
    %v914 = vpop.f32.mrf.mxu0
    %915 = vdwg.mxu0
    %916 = vmatpush.bf16.msra.mxu0 %v865
    %917 = vmatpush.bf16.msra.mxu0 %v862
    %918 = vmatpush.bf16.msra.mxu0 %v859
    %919 = vmatpush.bf16.msra.mxu0 %v856
    %920 = vmatpush.bf16.msra.mxu0 %v853
    %921 = vmatpush.bf16.msra.mxu0 %v850
    %922 = vmatpush.bf16.msra.mxu0 %v847
    %923 = vmatpush.bf16.msra.mxu0 %v844
    %924 = vmatmul.bf16.gmra.mxu0 %v761
    %v925 = vpop.f32.mrf.mxu0
    %v926 = vadd.f32 0.0, %v925
    %v927 = vpop.f32.mrf.mxu0
    %928 = vdwg.mxu0
    %s929 = scalar_lea.vmem %s6, 1
    %v930 = vld [vmem:[%s929] sm:$0x1]
    %v932 = vperm.slane %v930, 0
    %v934 = vadd.f32 %v900, %v932
    %s935 = scalar_lea.vmem %s7, 1
    %v936 = vld [vmem:[%s935] sm:$0x1]
    %v938 = vperm.slane %v936, 0
    %v940 = vadd.f32 %v913, %v938
    %v941 = vsel %vm91, %v934, %v940
    %s942 = scalar_lea.vmem %s9, 1
    %v943 = vld [vmem:[%s942] sm:$0x1]
    %v945 = vperm.slane %v943, 0
    %v947 = vadd.f32 %v926, %v945
    %s948 = scalar_lea.vmem %s5, 192
    %v949 = vld [vmem:[%s948] sm:$0xff]
    %v950 = vld [vmem:[%s948 + $0x8] sm:$0xf]
    %v951 = vld [vmem:[%s948 + $0xc] sm:$0xff]
    %v952 = vld [vmem:[%s948 + $0x14] sm:$0xf]
    %v953 = vld [vmem:[%s948 + $0x18] sm:$0xff]
    %v954 = vld [vmem:[%s948 + $0x20] sm:$0xf]
    %v955 = vld [vmem:[%s948 + $0x24] sm:$0xff]
    %v956 = vld [vmem:[%s948 + $0x2c] sm:$0xf]
    %v957 = vld [vmem:[%s948 + $0x30] sm:$0xff]
    %v958 = vld [vmem:[%s948 + $0x38] sm:$0xf]
    %v959 = vld [vmem:[%s948 + $0x3c] sm:$0xff]
    %v960 = vld [vmem:[%s948 + $0x44] sm:$0xf]
    %v961 = vld [vmem:[%s948 + $0x48] sm:$0xff]
    %v962 = vld [vmem:[%s948 + $0x50] sm:$0xf]
    %v963 = vld [vmem:[%s948 + $0x54] sm:$0xff]
    %v964 = vld [vmem:[%s948 + $0x5c] sm:$0xf]
    %v965 = vld [vmem:[%s948 + $0x60] sm:$0xff]
    %v966 = vld [vmem:[%s948 + $0x68] sm:$0xf]
    %v967 = vld [vmem:[%s948 + $0x6c] sm:$0xff]
    %v968 = vld [vmem:[%s948 + $0x74] sm:$0xf]
    %v969 = vld [vmem:[%s948 + $0x78] sm:$0xff]
    %v970 = vld [vmem:[%s948 + $0x80] sm:$0xf]
    %v971 = vld [vmem:[%s948 + $0x84] sm:$0xff]
    %v972 = vld [vmem:[%s948 + $0x8c] sm:$0xf]
    %v973 = vld [vmem:[%s948 + $0x90] sm:$0xff]
    %v974 = vld [vmem:[%s948 + $0x98] sm:$0xf]
    %v975 = vld [vmem:[%s948 + $0x9c] sm:$0xff]
    %v976 = vld [vmem:[%s948 + $0xa4] sm:$0xf]
    %v977 = vld [vmem:[%s948 + $0xa8] sm:$0xff]
    %v978 = vld [vmem:[%s948 + $0xb0] sm:$0xf]
    %v979 = vld [vmem:[%s948 + $0xb4] sm:$0xff]
    %v980 = vld [vmem:[%s948 + $0xbc] sm:$0xf]
    %v981 = vpack.c.bf16 %v720, %v719
    %v982 = vpack.c.bf16 %v722, %v721
    %v983 = vpack.c.bf16 %v724, %v723
    %v984 = vpack.c.bf16 %v726, %v725
    %v1017 = vunpack.c.l.b16 %v949
    %v1018 = vunpack.c.h.b16 %v949
    %v1019 = vunpack.c.l.b16 %v950
    %v1020 = vunpack.c.l.b16 %v951
    %v1021 = vunpack.c.h.b16 %v951
    %v1022 = vunpack.c.l.b16 %v952
    %v1023 = vunpack.c.l.b16 %v953
    %v1024 = vunpack.c.h.b16 %v953
    %v1025 = vunpack.c.l.b16 %v954
    %v1026 = vunpack.c.l.b16 %v955
    %v1027 = vunpack.c.h.b16 %v955
    %v1028 = vunpack.c.l.b16 %v956
    %v1029 = vunpack.c.l.b16 %v957
    %v1030 = vunpack.c.h.b16 %v957
    %v1031 = vunpack.c.l.b16 %v958
    %v1032 = vunpack.c.l.b16 %v959
    %v1033 = vunpack.c.h.b16 %v959
    %v1034 = vunpack.c.l.b16 %v960
    %v1035 = vunpack.c.l.b16 %v961
    %v1036 = vunpack.c.h.b16 %v961
    %v1037 = vunpack.c.l.b16 %v962
    %v1038 = vunpack.c.l.b16 %v963
    %v1039 = vunpack.c.h.b16 %v963
    %v1040 = vunpack.c.l.b16 %v964
    %v1041 = vunpack.c.l.b16 %v965
    %v1042 = vunpack.c.h.b16 %v965
    %v1043 = vunpack.c.l.b16 %v966
    %v1044 = vunpack.c.l.b16 %v967
    %v1045 = vunpack.c.h.b16 %v967
    %v1046 = vunpack.c.l.b16 %v968
    %v1047 = vunpack.c.l.b16 %v969
    %v1048 = vunpack.c.h.b16 %v969
    %v1049 = vunpack.c.l.b16 %v970
    %v1050 = vunpack.c.l.b16 %v971
    %v1051 = vunpack.c.h.b16 %v971
    %v1052 = vunpack.c.l.b16 %v972
    %v1053 = vunpack.c.l.b16 %v973
    %v1054 = vunpack.c.h.b16 %v973
    %v1055 = vunpack.c.l.b16 %v974
    %v1056 = vunpack.c.l.b16 %v975
    %v1057 = vunpack.c.h.b16 %v975
    %v1058 = vunpack.c.l.b16 %v976
    %v1059 = vunpack.c.l.b16 %v977
    %v1060 = vunpack.c.h.b16 %v977
    %v1061 = vunpack.c.l.b16 %v978
    %v1062 = vunpack.c.l.b16 %v979
    %v1063 = vunpack.c.h.b16 %v979
    %v1064 = vunpack.c.l.b16 %v980
    %v1065 = vpack.c.b16 %v1020, %v1017
    %v1066 = vpack.c.b16 %v1021, %v1018
    %v1067 = vpack.c.b16 %v1022, %v1019
    %v1068 = vpack.c.b16 %v1026, %v1023
    %v1069 = vpack.c.b16 %v1027, %v1024
    %v1070 = vpack.c.b16 %v1028, %v1025
    %v1071 = vpack.c.b16 %v1032, %v1029
    %v1072 = vpack.c.b16 %v1033, %v1030
    %v1073 = vpack.c.b16 %v1034, %v1031
    %v1074 = vpack.c.b16 %v1038, %v1035
    %v1075 = vpack.c.b16 %v1039, %v1036
    %v1076 = vpack.c.b16 %v1040, %v1037
    %v1077 = vpack.c.b16 %v1044, %v1041
    %v1078 = vpack.c.b16 %v1045, %v1042
    %v1079 = vpack.c.b16 %v1046, %v1043
    %v1080 = vpack.c.b16 %v1050, %v1047
    %v1081 = vpack.c.b16 %v1051, %v1048
    %v1082 = vpack.c.b16 %v1052, %v1049
    %v1083 = vpack.c.b16 %v1056, %v1053
    %v1084 = vpack.c.b16 %v1057, %v1054
    %v1085 = vpack.c.b16 %v1058, %v1055
    %v1086 = vpack.c.b16 %v1062, %v1059
    %v1087 = vpack.c.b16 %v1063, %v1060
    %v1088 = vpack.c.b16 %v1064, %v1061
    %1113 = vmatpush.bf16.msra.mxu0 %v1086
    %1114 = vmatpush.bf16.msra.mxu0 %v1083
    %1115 = vmatpush.bf16.msra.mxu0 %v1080
    %1116 = vmatpush.bf16.msra.mxu0 %v1077
    %1117 = vmatpush.bf16.msra.mxu0 %v1074
    %1118 = vmatpush.bf16.msra.mxu0 %v1071
    %1119 = vmatpush.bf16.msra.mxu0 %v1068
    %1120 = vmatpush.bf16.msra.mxu0 %v1065
    %1121 = vmatmul.bf16.gmra.mxu0 %v981
    %v1122 = vpop.f32.mrf.mxu0
    %v1123 = vadd.f32 0.0, %v1122
    %v1124 = vpop.f32.mrf.mxu0
    %v1125 = vadd.f32 0.0, %v1124
    %1126 = vmatmul.bf16.gmra.mxu0 %v982
    %v1127 = vpop.f32.mrf.mxu0
    %v1128 = vadd.f32 0.0, %v1127
    %v1129 = vpop.f32.mrf.mxu0
    %v1130 = vadd.f32 0.0, %v1129
    %1131 = vmatmul.bf16.gmra.mxu0 %v983
    %v1132 = vpop.f32.mrf.mxu0
    %v1133 = vadd.f32 0.0, %v1132
    %v1134 = vpop.f32.mrf.mxu0
    %v1135 = vadd.f32 0.0, %v1134
    %1136 = vmatmul.bf16.gmra.mxu0 %v984
    %v1137 = vpop.f32.mrf.mxu0
    %v1138 = vadd.f32 0.0, %v1137
    %v1139 = vpop.f32.mrf.mxu0
    %v1140 = vadd.f32 0.0, %v1139
    %1141 = vdwg.mxu0
    %1142 = vmatpush.bf16.msra.mxu0 %v1087
    %1143 = vmatpush.bf16.msra.mxu0 %v1084
    %1144 = vmatpush.bf16.msra.mxu0 %v1081
    %1145 = vmatpush.bf16.msra.mxu0 %v1078
    %1146 = vmatpush.bf16.msra.mxu0 %v1075
    %1147 = vmatpush.bf16.msra.mxu0 %v1072
    %1148 = vmatpush.bf16.msra.mxu0 %v1069
    %1149 = vmatpush.bf16.msra.mxu0 %v1066
    %1150 = vmatmul.bf16.gmra.mxu0 %v981
    %v1151 = vpop.f32.mrf.mxu0
    %v1152 = vadd.f32 0.0, %v1151
    %v1153 = vpop.f32.mrf.mxu0
    %v1154 = vadd.f32 0.0, %v1153
    %1155 = vmatmul.bf16.gmra.mxu0 %v982
    %v1156 = vpop.f32.mrf.mxu0
    %v1157 = vadd.f32 0.0, %v1156
    %v1158 = vpop.f32.mrf.mxu0
    %v1159 = vadd.f32 0.0, %v1158
    %1160 = vmatmul.bf16.gmra.mxu0 %v983
    %v1161 = vpop.f32.mrf.mxu0
    %v1162 = vadd.f32 0.0, %v1161
    %v1163 = vpop.f32.mrf.mxu0
    %v1164 = vadd.f32 0.0, %v1163
    %1165 = vmatmul.bf16.gmra.mxu0 %v984
    %v1166 = vpop.f32.mrf.mxu0
    %v1167 = vadd.f32 0.0, %v1166
    %v1168 = vpop.f32.mrf.mxu0
    %v1169 = vadd.f32 0.0, %v1168
    %1170 = vdwg.mxu0
    %1171 = vmatpush.bf16.msra.mxu0 %v1088
    %1172 = vmatpush.bf16.msra.mxu0 %v1085
    %1173 = vmatpush.bf16.msra.mxu0 %v1082
    %1174 = vmatpush.bf16.msra.mxu0 %v1079
    %1175 = vmatpush.bf16.msra.mxu0 %v1076
    %1176 = vmatpush.bf16.msra.mxu0 %v1073
    %1177 = vmatpush.bf16.msra.mxu0 %v1070
    %1178 = vmatpush.bf16.msra.mxu0 %v1067
    %1179 = vmatmul.bf16.gmra.mxu0 %v981
    %v1180 = vpop.f32.mrf.mxu0
    %v1181 = vadd.f32 0.0, %v1180
    %v1182 = vpop.f32.mrf.mxu0
    %v1183 = vadd.f32 0.0, %v1182
    %1184 = vmatmul.bf16.gmra.mxu0 %v982
    %v1185 = vpop.f32.mrf.mxu0
    %v1186 = vadd.f32 0.0, %v1185
    %v1187 = vpop.f32.mrf.mxu0
    %v1188 = vadd.f32 0.0, %v1187
    %1189 = vmatmul.bf16.gmra.mxu0 %v983
    %v1190 = vpop.f32.mrf.mxu0
    %v1191 = vadd.f32 0.0, %v1190
    %v1192 = vpop.f32.mrf.mxu0
    %v1193 = vadd.f32 0.0, %v1192
    %1194 = vmatmul.bf16.gmra.mxu0 %v984
    %v1195 = vpop.f32.mrf.mxu0
    %v1196 = vadd.f32 0.0, %v1195
    %v1197 = vpop.f32.mrf.mxu0
    %v1198 = vadd.f32 0.0, %v1197
    %1199 = vdwg.mxu0
    %1200 = vst [vmem:[#allocation2] sm:$0xff] %v941
    %1201 = vst [vmem:[#allocation2 + $0x8] sm:$0xff] %v1123
    %1202 = vst [vmem:[#allocation2 + $0x10] sm:$0xff] %v1125
    %1203 = vst [vmem:[#allocation2 + $0x18] sm:$0xff] %v1128
    %1204 = vst [vmem:[#allocation2 + $0x20] sm:$0xff] %v1130
    %1205 = vst [vmem:[#allocation2 + $0x28] sm:$0xff] %v1133
    %1206 = vst [vmem:[#allocation2 + $0x30] sm:$0xff] %v1135
    %1207 = vst [vmem:[#allocation2 + $0x38] sm:$0xff] %v1138
    %1208 = vst [vmem:[#allocation2 + $0x40] sm:$0xff] %v1140
    %1209 = vst [vmem:[#allocation2 + $0x48] sm:$0xff] %v1152
    %1210 = vst [vmem:[#allocation2 + $0x50] sm:$0xff] %v1154
    %1211 = vst [vmem:[#allocation2 + $0x58] sm:$0xff] %v1157
    %1212 = vst [vmem:[#allocation2 + $0x60] sm:$0xff] %v1159
    %1213 = vst [vmem:[#allocation2 + $0x68] sm:$0xff] %v1162
    %1214 = vst [vmem:[#allocation2 + $0x70] sm:$0xff] %v1164
    %1215 = vst [vmem:[#allocation2 + $0x78] sm:$0xff] %v1167
    %1216 = vst [vmem:[#allocation2 + $0x80] sm:$0xff] %v1169
    %v1217 = vld [vmem:[#allocation2] sm:$0xff]
    %v1218 = vld [vmem:[#allocation2 + $0x8] sm:$0xff]
    %v1219 = vld [vmem:[#allocation2 + $0x10] sm:$0xff]
    %v1220 = vld [vmem:[#allocation2 + $0x18] sm:$0xff]
    %v1221 = vld [vmem:[#allocation2 + $0x20] sm:$0xff]
    %v1222 = vld [vmem:[#allocation2 + $0x28] sm:$0xff]
    %v1223 = vld [vmem:[#allocation2 + $0x30] sm:$0xff]
    %v1224 = vld [vmem:[#allocation2 + $0x38] sm:$0xff]
    %v1225 = vld [vmem:[#allocation2 + $0x40] sm:$0xff]
    %v1226 = vld [vmem:[#allocation2 + $0x48] sm:$0xff]
    %v1227 = vld [vmem:[#allocation2 + $0x50] sm:$0xff]
    %v1228 = vld [vmem:[#allocation2 + $0x58] sm:$0xff]
    %v1229 = vld [vmem:[#allocation2 + $0x60] sm:$0xff]
    %v1230 = vld [vmem:[#allocation2 + $0x68] sm:$0xff]
    %v1231 = vld [vmem:[#allocation2 + $0x70] sm:$0xff]
    %v1232 = vld [vmem:[#allocation2 + $0x78] sm:$0xff]
    %v1233 = vld [vmem:[#allocation2 + $0x80] sm:$0xff]
    %1234 = vmatpush.msra.mxu0 %v1232
    %1235 = vmatpush.msra.mxu0 %v1231
    %1236 = vmatpush.msra.mxu0 %v1230
    %1237 = vmatpush.msra.mxu0 %v1229
    %1238 = vmatpush.msra.mxu0 %v1228
    %1239 = vmatpush.msra.mxu0 %v1227
    %1240 = vmatpush.msra.mxu0 %v1226
    %1241 = vmatpush.msra.mxu0 %v1225
    %1242 = vmatpush.msra.mxu0 %v1224
    %1243 = vmatpush.msra.mxu0 %v1223
    %1244 = vmatpush.msra.mxu0 %v1222
    %1245 = vmatpush.msra.mxu0 %v1221
    %1246 = vmatpush.msra.mxu0 %v1220
    %1247 = vmatpush.msra.mxu0 %v1219
    %1248 = vmatpush.msra.mxu0 %v1218
    %1249 = vmatpush.msra.mxu0 %v1217
    %1250 = vmatmul.f32.gmra.mxu0 %v73
    %v1251 = vpop.f32.mrf.mxu0
    %v1252 = vadd.f32 0.0, %v1251
    %1253 = vmatmul.f32.gmra.mxu0 %v75
    %v1254 = vpop.f32.mrf.mxu0
    %v1255 = vadd.f32 0.0, %v1254
    %1256 = vmatmul.f32.gmra.mxu0 %v77
    %v1257 = vpop.f32.mrf.mxu0
    %v1258 = vadd.f32 0.0, %v1257
    %1259 = vmatmul.f32.gmra.mxu0 %v79
    %v1260 = vpop.f32.mrf.mxu0
    %v1261 = vadd.f32 0.0, %v1260
    %1262 = vmatmul.f32.gmra.mxu0 %v81
    %v1263 = vpop.f32.mrf.mxu0
    %v1264 = vadd.f32 0.0, %v1263
    %1265 = vmatmul.f32.gmra.mxu0 %v83
    %v1266 = vpop.f32.mrf.mxu0
    %v1267 = vadd.f32 0.0, %v1266
    %1268 = vmatmul.f32.gmra.mxu0 %v85
    %v1269 = vpop.f32.mrf.mxu0
    %v1270 = vadd.f32 0.0, %v1269
    %1271 = vmatmul.f32.gmra.mxu0 %v87
    %v1272 = vpop.f32.mrf.mxu0
    %v1273 = vadd.f32 0.0, %v1272
    %1274 = vdwg.mxu0
    %1275 = vmatpush.msra.mxu0 0.0
    %1276 = vmatpush.msra.mxu0 0.0
    %1277 = vmatpush.msra.mxu0 0.0
    %1278 = vmatpush.msra.mxu0 0.0
    %1279 = vmatpush.msra.mxu0 0.0
    %1280 = vmatpush.msra.mxu0 0.0
    %1281 = vmatpush.msra.mxu0 0.0
    %1282 = vmatpush.msra.mxu0 0.0
    %1283 = vmatpush.msra.mxu0 0.0
    %1284 = vmatpush.msra.mxu0 0.0
    %1285 = vmatpush.msra.mxu0 0.0
    %1286 = vmatpush.msra.mxu0 0.0
    %1287 = vmatpush.msra.mxu0 0.0
    %1288 = vmatpush.msra.mxu0 0.0
    %1289 = vmatpush.msra.mxu0 0.0
    %1290 = vmatpush.msra.mxu0 %v1233
    %1291 = vmatmul.f32.gmra.mxu0 %v594
    %v1292 = vpop.f32.mrf.mxu0
    %v1293 = vadd.f32 %v1252, %v1292
    %1294 = vmatmul.f32.gmra.mxu0 %v597
    %v1295 = vpop.f32.mrf.mxu0
    %v1296 = vadd.f32 %v1255, %v1295
    %1297 = vmatmul.f32.gmra.mxu0 %v600
    %v1298 = vpop.f32.mrf.mxu0
    %v1299 = vadd.f32 %v1258, %v1298
    %1300 = vmatmul.f32.gmra.mxu0 %v603
    %v1301 = vpop.f32.mrf.mxu0
    %v1302 = vadd.f32 %v1261, %v1301
    %1303 = vmatmul.f32.gmra.mxu0 %v606
    %v1304 = vpop.f32.mrf.mxu0
    %v1305 = vadd.f32 %v1264, %v1304
    %1306 = vmatmul.f32.gmra.mxu0 %v609
    %v1307 = vpop.f32.mrf.mxu0
    %v1308 = vadd.f32 %v1267, %v1307
    %1309 = vmatmul.f32.gmra.mxu0 %v612
    %v1310 = vpop.f32.mrf.mxu0
    %v1311 = vadd.f32 %v1270, %v1310
    %1312 = vmatmul.f32.gmra.mxu0 %v615
    %v1313 = vpop.f32.mrf.mxu0
    %v1314 = vadd.f32 %v1273, %v1313
    %1315 = vdwg.mxu0
    %s1316 = scalar_lea.vmem %s8, 1
    %v1317 = vld [vmem:[%s1316] sm:$0x1]
    %v1319 = vperm.slane %v1317, 0
    %v1321 = vadd.f32 %v1181, %v1319
    %v1322 = vadd.f32 %v1183, %v1319
    %v1323 = vadd.f32 %v1186, %v1319
    %v1324 = vadd.f32 %v1188, %v1319
    %v1325 = vadd.f32 %v1191, %v1319
    %v1326 = vadd.f32 %v1193, %v1319
    %v1327 = vadd.f32 %v1196, %v1319
    %v1328 = vadd.f32 %v1198, %v1319
    %v1329 = vadd.f32 %v1321, %v1293
    %v1330 = vadd.f32 %v1322, %v1296
    %v1331 = vadd.f32 %v1323, %v1299
    %v1332 = vadd.f32 %v1324, %v1302
    %v1333 = vadd.f32 %v1325, %v1305
    %v1334 = vadd.f32 %v1326, %v1308
    %v1335 = vadd.f32 %v1327, %v1311
    %v1336 = vadd.f32 %v1328, %v1314
    %1337 = vst [vmem:[#allocation3] sm:$0xff] %v1329
    %1338 = vst [vmem:[#allocation3 + $0x8] sm:$0xff] %v1330
    %1339 = vst [vmem:[#allocation3 + $0x10] sm:$0xff] %v1331
    %1340 = vst [vmem:[#allocation3 + $0x18] sm:$0xff] %v1332
    %1341 = vst [vmem:[#allocation3 + $0x20] sm:$0xff] %v1333
    %1342 = vst [vmem:[#allocation3 + $0x28] sm:$0xff] %v1334
    %1343 = vst [vmem:[#allocation3 + $0x30] sm:$0xff] %v1335
    %1344 = vst [vmem:[#allocation3 + $0x38] sm:$0xff] %v1336
    %1345 = vst [vmem:[#allocation5] sm:$0xff] %v947
    // Predicated region
    $region42: #{ext_gnn_forward.1} parent=1 // pred_check
      _
    $region43: #{ext_gnn_forward.1} parent=1 // pred_check_branch
      %1347 = sbr.rel (0) target = $region45
    $region44: #{ext_gnn_forward.1} parent=1 // pred_region
      %1349 = vsyncadd [#allocation4], 0
      %s1350 = sshll.u32 [#allocation3], 4
      %s1351 = int_to_ptr.vmem [resolvable:$true] %s1350
      %s1352 = sshll.u32 %s10, 4
      %s1353 = int_to_ptr.hbm [resolvable:$true] %s1352
      %1358 = dma.vmem_to_hbm [thread:$0]  %s1351, 1024, %s1353, [#allocation4], 128, 128, 8
    $region45: #{ext_gnn_forward.1} parent=1 // pred_fallthru
      _
    // Predicated region
    $region46: #{ext_gnn_forward.1} parent=1 // pred_check
      _
    $region47: #{ext_gnn_forward.1} parent=1 // pred_check_branch
      %1360 = sbr.rel (0) target = $region49
    $region48: #{ext_gnn_forward.1} parent=1 // pred_region
      %1362 = vsyncadd [#allocation6], 0
      %s1364 = sshll.u32 [#allocation5], 4
      %s1365 = int_to_ptr.vmem [resolvable:$true] %s1364
      %s1366 = sshll.u32 %s11, 4
      %s1367 = int_to_ptr.hbm [resolvable:$true] %s1366
      %1369 = dma.vmem_to_hbm [thread:$0]  %s1365, 128, %s1367, [#allocation6]
    $region49: #{ext_gnn_forward.1} parent=1 // pred_fallthru
      _
    // Predicated region
    $region50: #{ext_gnn_forward.1} parent=1 // pred_check
      _
    $region51: #{ext_gnn_forward.1} parent=1 // pred_check_branch
      %1371 = sbr.rel (0) target = $region53
    $region52: #{ext_gnn_forward.1} parent=1 // pred_region
      %1373 = dma.done [#allocation4], 1024
    $region53: #{ext_gnn_forward.1} parent=1 // pred_fallthru
      _
    // Predicated region
    $region54: #{ext_gnn_forward.1} parent=1 // pred_check
      _
    $region55: #{ext_gnn_forward.1} parent=1 // pred_check_branch
      %1375 = sbr.rel (0) target = $region57
    $region56: #{ext_gnn_forward.1} parent=1 // pred_region
      %1377 = dma.done [#allocation6], 128
    $region57: #{ext_gnn_forward.1} parent=1 // pred_fallthru
      _
    %1378 = vsyncpa [#allocation4], 1
    %1379 = vsyncpa [#allocation6], 1

</llo_original>
